<compile_context>
chip_gen: v6e
topology: v6e:2x2x1
jax: 0.10.0
libtpu: 0.0.40
codegen_flags: <defaults>
</compile_context>

<pallas_src>
import functools

import jax
import jax.numpy as jnp
from jax import lax
from jax.experimental import pallas as pl
from jax.experimental.pallas import tpu as pltpu

_EPS = 1e-5
_VMEM_LIMIT = 64 * 1024 * 1024


def _layer_norm(x, g, b, eps=_EPS):
    """PyTorch-style LayerNorm over the last axis (biased variance)."""
    mean = jnp.mean(x, axis=-1, keepdims=True)
    xc = x - mean
    var = jnp.mean(xc * xc, axis=-1, keepdims=True)
    return xc * lax.rsqrt(var + eps) * g + b


# ---------------------------------------------------------------------------
# Kernel 1: _fc1 = Linear(768 -> ds) + GELU
# ---------------------------------------------------------------------------
def _fc1_gelu_kernel(x_ref, w_ref, b_ref, o_ref, *, matmul_dtype):
    x = x_ref[0].astype(matmul_dtype)                          # (N, IN)
    y = jnp.dot(x, w_ref[...], preferred_element_type=jnp.float32) + b_ref[...]
    # TODO(synk): PyTorch nn.GELU() default is the exact erf form; tanh approx here.
    o_ref[0] = jax.nn.gelu(y, approximate=True).astype(o_ref.dtype)


def fc1_gelu(x, w, b, *, matmul_dtype=jnp.float32):
    B, N, IN = x.shape
    OUT = w.shape[1]
    kernel = functools.partial(_fc1_gelu_kernel, matmul_dtype=matmul_dtype)
    return pl.pallas_call(
        kernel,
        out_shape=jax.ShapeDtypeStruct((B, N, OUT), jnp.float32),
        grid_spec=pltpu.PrefetchScalarGridSpec(
            num_scalar_prefetch=0,
            grid=(B,),
            in_specs=[
                pl.BlockSpec((1, N, IN), lambda bi: (bi, 0, 0)),
                pl.BlockSpec((IN, OUT), lambda bi: (0, 0)),
                pl.BlockSpec((1, OUT), lambda bi: (0, 0)),
            ],
            out_specs=pl.BlockSpec((1, N, OUT), lambda bi: (bi, 0, 0)),
        ),
        compiler_params=pltpu.CompilerParams(
            dimension_semantics=("parallel",),
            vmem_limit_bytes=_VMEM_LIMIT,
        ),
    )(x, w.astype(matmul_dtype), b.reshape(1, OUT).astype(jnp.float32))


# ---------------------------------------------------------------------------
# Kernel 2: TransLayer_N  (x + softmax-Attention(x)), fully fused
# ---------------------------------------------------------------------------
def _softmax_attn_layer_kernel(x_ref, g_ref, b_ref, wqkv_ref, gk_ref, bk_ref,
                               gv_ref, bv_ref, wout_ref, bout_ref, o_ref,
                               *, heads, dim_head, eps, matmul_dtype):
    x = x_ref[0].astype(jnp.float32)                           # (N, DIM)
    xn = _layer_norm(x, g_ref[...], b_ref[...], eps)

    # single packed QKV projection on the MXU, f32 accumulation
    qkv = jnp.dot(xn.astype(matmul_dtype), wqkv_ref[...],
                  preferred_element_type=jnp.float32)          # (N, 3*inner)
    inner = heads * dim_head
    scale = dim_head ** -0.5

    outs = []
    for h in range(heads):                                     # unrolled at trace time
        lo = h * dim_head
        qh = qkv[:, lo:lo + dim_head]                          # (N, dh)
        kh = _layer_norm(qkv[:, inner + lo:inner + lo + dim_head],
                         gk_ref[...], bk_ref[...], eps)        # norm_k
        vh = _layer_norm(qkv[:, 2 * inner + lo:2 * inner + lo + dim_head],
                         gv_ref[...], bv_ref[...], eps)        # norm_v
        # scores = q @ k^T : contract the head dim directly (no explicit transpose)
        s = lax.dot_general(qh.astype(matmul_dtype), kh.astype(matmul_dtype),
                            dimension_numbers=(((1,), (1,)), ((), ())),
                            preferred_element_type=jnp.float32) * scale  # (N, N)
        s = s - jnp.max(s, axis=-1, keepdims=True)
        p = jnp.exp(s)
        p = p / jnp.sum(p, axis=-1, keepdims=True)
        outs.append(jnp.dot(p.astype(matmul_dtype), vh.astype(matmul_dtype),
                            preferred_element_type=jnp.float32))          # (N, dh)

    attn = jnp.concatenate(outs, axis=-1)                      # 'b h n d -> b n (h d)'
    out = jnp.dot(attn.astype(matmul_dtype), wout_ref[...],
                  preferred_element_type=jnp.float32) + bout_ref[...]
    o_ref[0] = (x + out).astype(o_ref.dtype)                   # residual add


def softmax_attention_layer(x, p, *, heads, dim_head, eps=_EPS,
                            matmul_dtype=jnp.float32):
    B, N, DIM = x.shape
    inner = heads * dim_head
    kernel = functools.partial(_softmax_attn_layer_kernel, heads=heads,
                               dim_head=dim_head, eps=eps, matmul_dtype=matmul_dtype)
    return pl.pallas_call(
        kernel,
        out_shape=jax.ShapeDtypeStruct((B, N, DIM), x.dtype),
        grid_spec=pltpu.PrefetchScalarGridSpec(
            num_scalar_prefetch=0,
            grid=(B,),
            in_specs=[
                pl.BlockSpec((1, N, DIM), lambda bi: (bi, 0, 0)),     # x[b]
                pl.BlockSpec((1, DIM), lambda bi: (0, 0)),            # LN gamma
                pl.BlockSpec((1, DIM), lambda bi: (0, 0)),            # LN beta
                pl.BlockSpec((DIM, 3 * inner), lambda bi: (0, 0)),    # packed W_qkv
                pl.BlockSpec((1, dim_head), lambda bi: (0, 0)),       # norm_k gamma
                pl.BlockSpec((1, dim_head), lambda bi: (0, 0)),       # norm_k beta
                pl.BlockSpec((1, dim_head), lambda bi: (0, 0)),       # norm_v gamma
                pl.BlockSpec((1, dim_head), lambda bi: (0, 0)),       # norm_v beta
                pl.BlockSpec((inner, DIM), lambda bi: (0, 0)),        # W_out
                pl.BlockSpec((1, DIM), lambda bi: (0, 0)),            # b_out
            ],
            out_specs=pl.BlockSpec((1, N, DIM), lambda bi: (bi, 0, 0)),
        ),
        compiler_params=pltpu.CompilerParams(
            dimension_semantics=("parallel",),
            vmem_limit_bytes=_VMEM_LIMIT,
        ),
    )(x,
      p["ln_g"].reshape(1, DIM), p["ln_b"].reshape(1, DIM),
      p["w_qkv"].astype(matmul_dtype),
      p["ln_k_g"].reshape(1, dim_head), p["ln_k_b"].reshape(1, dim_head),
      p["ln_v_g"].reshape(1, dim_head), p["ln_v_b"].reshape(1, dim_head),
      p["w_out"].astype(matmul_dtype), p["b_out"].reshape(1, DIM))


# ---------------------------------------------------------------------------
# Kernel 3: TransLayer_L  (x + LinearAttention(x)), fully fused
# ---------------------------------------------------------------------------
def _linear_attn_layer_kernel(x_ref, g_ref, b_ref, w_ref, o_ref,
                              *, heads, eps, matmul_dtype):
    x = x_ref[0].astype(jnp.float32)                           # (N, DIM)
    n, dim = x.shape
    d = dim // heads
    xn = _layer_norm(x, g_ref[...], b_ref[...], eps)

    qkv = jnp.dot(xn.astype(matmul_dtype), w_ref[...],
                  preferred_element_type=jnp.float32)          # (N, 3*DIM)
    q = jax.nn.sigmoid(qkv[:, :dim]).astype(matmul_dtype)
    k = jnp.tanh(qkv[:, dim:2 * dim]).astype(matmul_dtype)
    v = qkv[:, 2 * dim:].astype(matmul_dtype)

    outs = []
    for h in range(heads):                                     # unrolled at trace time
        lo = h * d
        # kvw = k^T @ v : contract the N axis directly (no explicit transpose)
        kvw = lax.dot_general(k[:, lo:lo + d], v[:, lo:lo + d],
                              dimension_numbers=(((0,), (0,)), ((), ())),
                              preferred_element_type=jnp.float32)          # (d, d)
        outs.append(jnp.dot(q[:, lo:lo + d], kvw.astype(matmul_dtype),
                            preferred_element_type=jnp.float32))           # (N, d)

    # residual add + single lane-dense store: 'b h n d -> b n (h d)'
    o_ref[0] = (x + jnp.concatenate(outs, axis=-1)).astype(o_ref.dtype)


def linear_attention_layer(x, p, *, heads, eps=_EPS, matmul_dtype=jnp.float32):
    B, N, DIM = x.shape
    assert DIM % heads == 0
    kernel = functools.partial(_linear_attn_layer_kernel, heads=heads, eps=eps,
                               matmul_dtype=matmul_dtype)
    return pl.pallas_call(
        kernel,
        out_shape=jax.ShapeDtypeStruct((B, N, DIM), x.dtype),
        grid_spec=pltpu.PrefetchScalarGridSpec(
            num_scalar_prefetch=0,
            grid=(B,),
            in_specs=[
                pl.BlockSpec((1, N, DIM), lambda bi: (bi, 0, 0)),     # x[b]
                pl.BlockSpec((1, DIM), lambda bi: (0, 0)),            # LN gamma
                pl.BlockSpec((1, DIM), lambda bi: (0, 0)),            # LN beta
                pl.BlockSpec((DIM, 3 * DIM), lambda bi: (0, 0)),      # packed W_qkv
            ],
            out_specs=pl.BlockSpec((1, N, DIM), lambda bi: (bi, 0, 0)),
        ),
        compiler_params=pltpu.CompilerParams(
            dimension_semantics=("parallel",),
            vmem_limit_bytes=_VMEM_LIMIT,
        ),
    )(x, p["ln_g"].reshape(1, DIM), p["ln_b"].reshape(1, DIM),
      p["w_qkv"].astype(matmul_dtype))


# ---------------------------------------------------------------------------
# Full Layer1 forward (Pallas path)
# ---------------------------------------------------------------------------
def layer1_forward(data, params, *, heads_n=8, dim_head=64, heads_l=8,
                   matmul_dtype=jnp.float32):
    h = fc1_gelu(data.astype(jnp.float32), params["w_fc1"], params["b_fc1"],
                 matmul_dtype=matmul_dtype)
    h = softmax_attention_layer(h, params["l1"], heads=heads_n, dim_head=dim_head,
                                matmul_dtype=matmul_dtype)
    h = softmax_attention_layer(h, params["l2"], heads=heads_n, dim_head=dim_head,
                                matmul_dtype=matmul_dtype)
    B = h.shape[0]
    cls = jnp.broadcast_to(params["cls_token"], (B, 1, h.shape[-1]))
    h = jnp.concatenate([cls, h], axis=1)                      # (B, N+1, ds)
    h = linear_attention_layer(h, params["l3"], heads=heads_l,
                               matmul_dtype=matmul_dtype)
    h = linear_attention_layer(h, params["l4"], heads=heads_l,
                               matmul_dtype=matmul_dtype)
    # tiny classifier head in plain JAX (logits are only 3 lanes wide)
    h_cls = _layer_norm(h, params["norm_g"], params["norm_b"])[:, 0]      # (B, ds)
    logits = h_cls @ params["w_fc2"] + params["b_fc2"]
    y_prob = jax.nn.sigmoid(logits)
    y_hat = (logits >= 0.5).astype(jnp.float32)
    return {"logits": logits, "Y_prob": y_prob, "Y_hat": y_hat}, h_cls


# ---------------------------------------------------------------------------
# Pure-JAX reference (mirrors the PyTorch forward, mask=None, dropout=0)
# ---------------------------------------------------------------------------
def _ref_softmax_attn_layer(x, p, heads, dim_head):
    B, N, DIM = x.shape
    inner = heads * dim_head
    xn = _layer_norm(x, p["ln_g"], p["ln_b"])
    qkv = xn @ p["w_qkv"]
    q, k, v = jnp.split(qkv, 3, axis=-1)
    to_h = lambda t: t.reshape(B, N, heads, dim_head).transpose(0, 2, 1, 3)
    q, k, v = map(to_h, (q, k, v))
    k = _layer_norm(k, p["ln_k_g"], p["ln_k_b"])
    v = _layer_norm(v, p["ln_v_g"], p["ln_v_b"])
    s = jnp.einsum("bhnd,bhmd->bhnm", q, k) * (dim_head ** -0.5)
    a = jax.nn.softmax(s, axis=-1)
    o = jnp.einsum("bhnm,bhmd->bhnd", a, v)
    o = o.transpose(0, 2, 1, 3).reshape(B, N, inner)
    return x + (o @ p["w_out"] + p["b_out"])


def _ref_linear_attn_layer(x, p, heads):
    B, N, DIM = x.shape
    d = DIM // heads
    xn = _layer_norm(x, p["ln_g"], p["ln_b"])
    qkv = xn @ p["w_qkv"]
    q, k, v = jnp.split(qkv, 3, axis=-1)
    to_h = lambda t: t.reshape(B, N, heads, d).transpose(0, 2, 1, 3)
    q, k, v = map(to_h, (q, k, v))
    q = jax.nn.sigmoid(q)
    k = jnp.tanh(k)
    kvw = jnp.einsum("bhnd,bhne->bhde", k, v)
    o = jnp.einsum("bhnd,bhde->bhne", q, kvw)
    return x + o.transpose(0, 2, 1, 3).reshape(B, N, DIM)


def _ref_forward(data, params, *, heads_n=8, dim_head=64, heads_l=8):
    h = data.astype(jnp.float32) @ params["w_fc1"] + params["b_fc1"]
    h = jax.nn.gelu(h, approximate=True)
    h = _ref_softmax_attn_layer(h, params["l1"], heads_n, dim_head)
    h = _ref_softmax_attn_layer(h, params["l2"], heads_n, dim_head)
    B = h.shape[0]
    cls = jnp.broadcast_to(params["cls_token"], (B, 1, h.shape[-1]))
    h = jnp.concatenate([cls, h], axis=1)
    h = _ref_linear_attn_layer(h, params["l3"], heads_l)
    h = _ref_linear_attn_layer(h, params["l4"], heads_l)
    h_cls = _layer_norm(h, params["norm_g"], params["norm_b"])[:, 0]
    logits = h_cls @ params["w_fc2"] + params["b_fc2"]
    return logits, h_cls


# ---------------------------------------------------------------------------
# Deterministic synthetic parameters (not loading a checkpoint)
# ---------------------------------------------------------------------------
def init_params(key, *, in_dim=768, ds=512, heads_n=8, dim_head=64, n_classes=3):
    ks = jax.random.split(key, 16)
    inner = heads_n * dim_head

    def lin(k, fi, fo):
        return jax.random.normal(k, (fi, fo), jnp.float32) * (fi ** -0.5)

    def ln(k, d):
        kg, kb = jax.random.split(k)
        return (jnp.ones((d,), jnp.float32) + 0.01 * jax.random.normal(kg, (d,)),
                0.01 * jax.random.normal(kb, (d,), jnp.float32))

    def attn_n(k):
        k1, k2, k3, k4, k5, k6 = jax.random.split(k, 6)
        g, b = ln(k4, ds)
        gk, bk = ln(k5, dim_head)
        gv, bv = ln(k6, dim_head)
        return {"ln_g": g, "ln_b": b,
                "w_qkv": lin(k1, ds, 3 * inner),
                "ln_k_g": gk, "ln_k_b": bk, "ln_v_g": gv, "ln_v_b": bv,
                "w_out": lin(k2, inner, ds),
                "b_out": 0.01 * jax.random.normal(k3, (ds,), jnp.float32)}

    def attn_l(k):
        k1, k2 = jax.random.split(k)
        g, b = ln(k2, ds)
        return {"ln_g": g, "ln_b": b, "w_qkv": lin(k1, ds, 3 * ds)}

    norm_g, norm_b = ln(ks[9], ds)
    return {
        "w_fc1": lin(ks[0], in_dim, ds),
        "b_fc1": 0.01 * jax.random.normal(ks[1], (ds,), jnp.float32),
        "cls_token": jax.random.normal(ks[2], (1, 1, ds), jnp.float32),
        "l1": attn_n(ks[3]), "l2": attn_n(ks[4]),
        "l3": attn_l(ks[5]), "l4": attn_l(ks[6]),
        "norm_g": norm_g, "norm_b": norm_b,
        "w_fc2": lin(ks[7], ds, n_classes),
        "b_fc2": 0.01 * jax.random.normal(ks[8], (n_classes,), jnp.float32),
    }


if __name__ == "__main__":
    # Small shapes consistent with the module: feature dim 768 and ds=512 are fixed
    # by the architecture; batch and sequence kept small.
    B, N, IN_DIM, DS = 2, 8, 768, 512
    HEADS_N, DIM_HEAD, HEADS_L, N_CLASSES = 8, 64, 8, 3

    key = jax.random.PRNGKey(0)
    k_data, k_par = jax.random.split(key)
    data = jax.random.normal(k_data, (B, N, IN_DIM), jnp.float32)
    params = init_params(k_par, in_dim=IN_DIM, ds=DS, heads_n=HEADS_N,
                         dim_head=DIM_HEAD, n_classes=N_CLASSES)

    # f32-operand Pallas path
    results, h_cls = layer1_forward(data, params, heads_n=HEADS_N,
                                    dim_head=DIM_HEAD, heads_l=HEADS_L)
    results = jax.block_until_ready(results)
    h_cls = jax.block_until_ready(h_cls)

    assert results["logits"].shape == (B, N_CLASSES)
    assert results["Y_prob"].shape == (B, N_CLASSES)
    assert results["Y_hat"].shape == (B, N_CLASSES)
    assert h_cls.shape == (B, DS)

    # pure-JAX reference check
    logits_ref, h_ref = _ref_forward(data, params, heads_n=HEADS_N,
                                     dim_head=DIM_HEAD, heads_l=HEADS_L)
    assert jnp.allclose(h_cls, h_ref, rtol=2e-3, atol=2e-3), "h mismatch vs reference"
    assert jnp.allclose(results["logits"], logits_ref, rtol=2e-3, atol=2e-3), \
        "logits mismatch vs reference"

    # bf16 matmul-operand fast path (v6e/v7x): verify it runs and produces finite output.
    results_bf16, h_bf16 = layer1_forward(data, params, heads_n=HEADS_N,
                                          dim_head=DIM_HEAD, heads_l=HEADS_L,
                                          matmul_dtype=jnp.bfloat16)
    h_bf16 = jax.block_until_ready(h_bf16)
    assert bool(jnp.all(jnp.isfinite(h_bf16)))

    print("KERNEL_OK")
</pallas_src>

<mosaic_0001>
module attributes {stable_mosaic.version = 11 : i64} {
  func.func @_fc1_gelu_kernel(%arg0: i32, %arg1: memref<1x8x768xf32, #tpu.memory_space<vmem>>, %arg2: memref<768x512xf32, #tpu.memory_space<vmem>>, %arg3: memref<1x512xf32, #tpu.memory_space<vmem>>, %arg4: memref<1x8x512xf32, #tpu.memory_space<vmem>>) attributes {dimension_semantics = [#tpu.dimension_semantics<parallel>], iteration_bounds = array<i64: 2>, scalar_prefetch = 0 : i64, scratch_operands = 0 : i64, tpu.core_type = #tpu.core_type<tc>, window_params = [{transform_indices = @transform_0, window_bounds = array<i64: 1, 8, 768>}, {pipeline_mode = #tpu.pipeline_mode<synchronous>, transform_indices = @transform_1, window_bounds = array<i64: 768, 512>}, {pipeline_mode = #tpu.pipeline_mode<synchronous>, transform_indices = @transform_2, window_bounds = array<i64: 1, 512>}, {transform_indices = @transform_3, window_bounds = array<i64: 1, 8, 512>}]} {
    %c0 = arith.constant 0 : index
    %c0_0 = arith.constant 0 : index
    %c0_1 = arith.constant 0 : index
    %0 = vector.load %arg1[%c0, %c0_0, %c0_1] : memref<1x8x768xf32, #tpu.memory_space<vmem>>, vector<1x8x768xf32>
    %1 = vector.shape_cast %0 : vector<1x8x768xf32> to vector<8x768xf32>
    %c0_2 = arith.constant 0 : index
    %c0_3 = arith.constant 0 : index
    %2 = vector.load %arg2[%c0_2, %c0_3] : memref<768x512xf32, #tpu.memory_space<vmem>>, vector<768x512xf32>
    %cst = arith.constant dense<0.000000e+00> : vector<8x512xf32>
    %3 = tpu.matmul %1, %2, %cst {dimension_numbers = #tpu.dot_dimension_numbers<[1], [0], [0], [1], [0, 0, 1, 1], [], []>} : vector<8x768xf32>, vector<768x512xf32>, vector<8x512xf32> -> vector<8x512xf32>
    %c0_4 = arith.constant 0 : index
    %c0_5 = arith.constant 0 : index
    %4 = vector.load %arg3[%c0_4, %c0_5] : memref<1x512xf32, #tpu.memory_space<vmem>>, vector<1x512xf32>
    %5 = vector.broadcast %4 : vector<1x512xf32> to vector<8x512xf32>
    %6 = arith.addf %3, %5 : vector<8x512xf32>
    %7 = arith.mulf %6, %6 : vector<8x512xf32>
    %8 = arith.mulf %6, %7 : vector<8x512xf32>
    %cst_6 = arith.constant 4.471500e-02 : f32
    %9 = vector.broadcast %cst_6 : f32 to vector<8x512xf32>
    %10 = arith.mulf %9, %8 : vector<8x512xf32>
    %11 = arith.addf %6, %10 : vector<8x512xf32>
    %cst_7 = arith.constant 0.797884583 : f32
    %12 = vector.broadcast %cst_7 : f32 to vector<8x512xf32>
    %13 = arith.mulf %12, %11 : vector<8x512xf32>
    %14 = math.tanh %13 : vector<8x512xf32>
    %cst_8 = arith.constant 1.000000e+00 : f32
    %15 = vector.broadcast %cst_8 : f32 to vector<8x512xf32>
    %16 = arith.addf %15, %14 : vector<8x512xf32>
    %cst_9 = arith.constant 5.000000e-01 : f32
    %17 = vector.broadcast %cst_9 : f32 to vector<8x512xf32>
    %18 = arith.mulf %17, %16 : vector<8x512xf32>
    %19 = arith.mulf %6, %18 : vector<8x512xf32>
    %c0_10 = arith.constant 0 : index
    %c0_11 = arith.constant 0 : index
    %c0_12 = arith.constant 0 : index
    %20 = vector.load %arg4[%c0_10, %c0_11, %c0_12] : memref<1x8x512xf32, #tpu.memory_space<vmem>>, vector<1x8x512xf32>
    %21 = vector.shape_cast %20 : vector<1x8x512xf32> to vector<8x512xf32>
    %22 = vector.shape_cast %19 : vector<8x512xf32> to vector<1x8x512xf32>
    tpu.vector_store %arg4[%c0_10, %c0_11, %c0_12], %22 {strides = array<i32>} : memref<1x8x512xf32, #tpu.memory_space<vmem>>, vector<1x8x512xf32>,
    return
  }
  func.func @transform_0(%arg0: i32) -> (i32, i32, i32) {
    %c0_i32 = arith.constant 0 : i32
    %c0_i32_0 = arith.constant 0 : i32
    %c0_i32_1 = arith.constant 0 : i32
    return %arg0, %c0_i32, %c0_i32_0 : i32, i32, i32
  }
  func.func @transform_1(%arg0: i32) -> (i32, i32) {
    %c0_i32 = arith.constant 0 : i32
    %c0_i32_0 = arith.constant 0 : i32
    %c0_i32_1 = arith.constant 0 : i32
    return %c0_i32, %c0_i32_0 : i32, i32
  }
  func.func @transform_2(%arg0: i32) -> (i32, i32) {
    %c0_i32 = arith.constant 0 : i32
    %c0_i32_0 = arith.constant 0 : i32
    %c0_i32_1 = arith.constant 0 : i32
    return %c0_i32, %c0_i32_0 : i32, i32
  }
  func.func @transform_3(%arg0: i32) -> (i32, i32, i32) {
    %c0_i32 = arith.constant 0 : i32
    %c0_i32_0 = arith.constant 0 : i32
    %c0_i32_1 = arith.constant 0 : i32
    return %arg0, %c0_i32, %c0_i32_0 : i32, i32, i32
  }
}

</mosaic_0001>

<llo_original>
// kernel: tpu_custom_call.1
$region0: #{tpu_custom_call.1}
  #allocation0 [shape = 'u32[]', space=smem, size = 0x4, offset = 0x4, fixed_abs, tag = 'smem constant byte address 0x4 - core index']
  #allocation1 [shape = 'u32[144,128]{1,0:T(1,128)}', space=vmem, size = 0x12000, scoped, tag = 'internal scratch']
  %s0 = inlined_call_operand.hbm [shape: f32[2,8,768], index: 0, kind: input, shape index: {}]
  %s1 = inlined_call_operand.hbm [shape: f32[768,512], index: 1, kind: input, shape index: {}]
  %s2 = inlined_call_operand.hbm [shape: f32[1,512], index: 2, kind: input, shape index: {}]
  %s3 = inlined_call_operand.hbm [shape: f32[2,8,512], index: 3, kind: output, shape index: {}]
  %s4 = sld [smem:[#allocation0]]
  $region57: #{tpu_custom_call.1} parent=0
    _
  %s6 = ssub.s32 1, %s4
  %s7 = scalar_select 0, %s6, %s4
  $region1: #{tpu_custom_call.1} parent=0
    #allocation2 [shape = 'u8[49152]{0}', space=vmem, size = 0xc000, scoped, tag = 'input window, operand 0']
    #allocation3 [shape = 's32[2]{0}', space=sflag, size = 0x8, scoped, tag = 'scoped memory for tpu_custom_call.1']
    #allocation4 [shape = 's32[2]{0}', space=sflag, size = 0x8, scoped, tag = 'scoped memory for tpu_custom_call.1']
    #allocation5 [shape = 'u8[1572864]{0}', space=vmem, size = 0x180000, scoped, tag = 'input window, operand 1, single buffered']
    #allocation6 [shape = 's32[1]{0}', space=sflag, size = 0x4, scoped, tag = 'scoped memory for tpu_custom_call.1']
    #allocation7 [shape = 'u8[2048]{0}', space=vmem, size = 0x800, scoped, tag = 'input window, operand 2, single buffered']
    #allocation8 [shape = 'u8[32768]{0}', space=vmem, size = 0x8000, scoped, tag = 'output window, operand 0']
    %8 = vsyncpa [#allocation3], 0
    %s9 = scalar_lea.sflag [#allocation3], 1
    %10 = vsyncpa %s9, 0
    %11 = vsyncpa [#allocation6], 0
    %12 = vsyncpa [#allocation4], 0
    %s13 = scalar_lea.sflag [#allocation4], 1
    %14 = vsyncpa %s13, 0
    loop: start=0, step=1, limit=4
    $region2: #{tpu_custom_call.1} parent=1 // loop_pre_header
      _
    $region3: #{tpu_custom_call.1} parent=1 // loop_header
      %s16 = sphi 0, %s20
      %p17 = scmp.ge.s32.totalorder %s16, 4
      %s26 = sphi 0, %s28
      %s29 = sphi 0, %s26
      %s30 = sphi 0, %s29
      %s46 = sphi 0, %s30
      %s50 = sphi 0, %s50
      %s52 = sphi 0, %s50
      %s53 = sphi 0, %s52
      %s67 = sphi 0, %s53
      %s71 = sphi 0, %s71
      %s73 = sphi 0, %s71
      %s74 = sphi 0, %s73
      %s88 = sphi 0, %s74
      %s94 = sphi 0, %s96
      %s97 = sphi 0, %s94
      %s98 = sphi 0, %s97
      %s114 = sphi 0, %s98
    $region4: #{tpu_custom_call.1} parent=1 // loop_header_branch
      %19 = sbr.rel (%p17) target = $region8
    $region5: #{tpu_custom_call.1} parent=1 // loop_body
      %s21 = ssub.s32 %s16, 1
      %s22 = ssub.s32 %s16, 2
      %s23 = sadd.s32 %s16, 1
      %s24 = ssub.s32 %s16, %s23
      %p25 = scmp.eq.s32.totalorder %s24, 0
      %s27 = sadd.s32 %s26, 1
      %s28 = scalar_select %p25, %s26, %s27
      %p31 = pneg %p25
      %p32 = scmp.eq.s32.totalorder %s16, 1
      %p33 = por %p31, %p32
      %p34 = scmp.ne.s32.totalorder %s26, %s29
      %p35 = scmp.eq.s32.totalorder %s16, 0
      %p36 = por %p34, %p35
      %p37 = scmp.ne.s32.totalorder %s26, %s29
      %p38 = scmp.eq.s32.totalorder %s21, 1
      %p39 = por %p37, %p38
      %p40 = scmp.ne.s32.totalorder %s29, %s30
      %p41 = scmp.eq.s32.totalorder %s21, 0
      %p42 = por %p40, %p41
      %p43 = scmp.ne.s32.totalorder %s29, %s30
      %p44 = scmp.eq.s32.totalorder %s22, 1
      %p45 = por %p43, %p44
      %p47 = scmp.ne.s32.totalorder %s30, %s46
      %p48 = scmp.eq.s32.totalorder %s22, 0
      %p49 = por %p47, %p48
      %s51 = sadd.s32 %s50, 1
      %p54 = scmp.eq.s32.totalorder %s16, 1
      %p55 = scmp.ne.s32.totalorder %s50, %s52
      %p56 = scmp.eq.s32.totalorder %s16, 0
      %p57 = por %p55, %p56
      %p58 = scmp.ne.s32.totalorder %s50, %s52
      %p59 = scmp.eq.s32.totalorder %s21, 1
      %p60 = por %p58, %p59
      %p61 = scmp.ne.s32.totalorder %s52, %s53
      %p62 = scmp.eq.s32.totalorder %s21, 0
      %p63 = por %p61, %p62
      %p64 = scmp.ne.s32.totalorder %s52, %s53
      %p65 = scmp.eq.s32.totalorder %s22, 1
      %p66 = por %p64, %p65
      %p68 = scmp.ne.s32.totalorder %s53, %s67
      %p69 = scmp.eq.s32.totalorder %s22, 0
      %p70 = por %p68, %p69
      %s72 = sadd.s32 %s71, 1
      %p75 = scmp.eq.s32.totalorder %s16, 1
      %p76 = scmp.ne.s32.totalorder %s71, %s73
      %p77 = scmp.eq.s32.totalorder %s16, 0
      %p78 = por %p76, %p77
      %p79 = scmp.ne.s32.totalorder %s71, %s73
      %p80 = scmp.eq.s32.totalorder %s21, 1
      %p81 = por %p79, %p80
      %p82 = scmp.ne.s32.totalorder %s73, %s74
      %p83 = scmp.eq.s32.totalorder %s21, 0
      %p84 = por %p82, %p83
      %p85 = scmp.ne.s32.totalorder %s73, %s74
      %p86 = scmp.eq.s32.totalorder %s22, 1
      %p87 = por %p85, %p86
      %p89 = scmp.ne.s32.totalorder %s74, %s88
      %p90 = scmp.eq.s32.totalorder %s22, 0
      %p91 = por %p89, %p90
      %s92 = ssub.s32 %s16, %s23
      %p93 = scmp.eq.s32.totalorder %s92, 0
      %s95 = sadd.s32 %s94, 1
      %s96 = scalar_select %p93, %s94, %s95
      %p99 = pneg %p93
      %p100 = scmp.eq.s32.totalorder %s16, 1
      %p101 = por %p99, %p100
      %p102 = scmp.ne.s32.totalorder %s94, %s97
      %p103 = scmp.eq.s32.totalorder %s16, 0
      %p104 = por %p102, %p103
      %p105 = scmp.ne.s32.totalorder %s94, %s97
      %p106 = scmp.eq.s32.totalorder %s21, 1
      %p107 = por %p105, %p106
      %p108 = scmp.ne.s32.totalorder %s97, %s98
      %p109 = scmp.eq.s32.totalorder %s21, 0
      %p110 = por %p108, %p109
      %p111 = scmp.ne.s32.totalorder %s97, %s98
      %p112 = scmp.eq.s32.totalorder %s22, 1
      %p113 = por %p111, %p112
      %p115 = scmp.ne.s32.totalorder %s98, %s114
      %p116 = scmp.eq.s32.totalorder %s22, 0
      %p117 = por %p115, %p116
      %p118 = scmp.le.s32.totalorder 1, %s16
      %p119 = scmp.lt.s32.totalorder %s16, 3
      %p120 = pnand %p118, %p119
      %p121 = pneg %p120
      // Predicated region
      $region9: #{tpu_custom_call.1} parent=5 // pred_check
        _
      $region10: #{tpu_custom_call.1} parent=5 // pred_check_branch
        %123 = sbr.rel (%p120) target = $region12
      $region11: #{tpu_custom_call.1} parent=5 // pred_region
        %s124 = ssub.s32 %s16, 1
        // Predicated region
        $region13: #{tpu_custom_call.1} parent=11 // pred_check
          %p125 = pneg %p63
        $region14: #{tpu_custom_call.1} parent=11 // pred_check_branch
          %127 = sbr.rel (%p125) target = $region16
        $region15: #{tpu_custom_call.1} parent=11 // pred_region
          %s129 = ssub.s32 49152, 49152
          %130 = vsyncadd [#allocation6], %s129
          %s131 = sshll.u32 [#allocation5], 4
          %s132 = int_to_ptr.vmem [resolvable:$true] %s131
          %137 = dma.hbm_to_vmem [thread:$0]  %s1, 49152, %s132, [#allocation6], 512, 512, 32
        $region16: #{tpu_custom_call.1} parent=11 // pred_fallthru
          _
        // Predicated region
        $region17: #{tpu_custom_call.1} parent=11 // pred_check
          %p138 = pneg %p84
        $region18: #{tpu_custom_call.1} parent=11 // pred_check_branch
          %140 = sbr.rel (%p138) target = $region20
        $region19: #{tpu_custom_call.1} parent=11 // pred_region
          %s142 = ssub.s32 64, 64
          %143 = vsyncadd [#allocation6], %s142
          %s145 = sshll.u32 [#allocation7], 4
          %s146 = int_to_ptr.vmem [resolvable:$true] %s145
          %148 = dma.hbm_to_vmem [thread:$0]  %s2, 64, %s146, [#allocation6]
        $region20: #{tpu_custom_call.1} parent=11 // pred_fallthru
          _
      $region12: #{tpu_custom_call.1} parent=5 // pred_fallthru
        _
      %p149 = scmp.lt.s32.totalorder %s16, 2
      // Predicated region
      $region21: #{tpu_custom_call.1} parent=5 // pred_check
        %p150 = pneg %p149
      $region22: #{tpu_custom_call.1} parent=5 // pred_check_branch
        %152 = sbr.rel (%p150) target = $region24
      $region23: #{tpu_custom_call.1} parent=5 // pred_region
        // Predicated region
        $region25: #{tpu_custom_call.1} parent=23 // pred_check
          %p153 = pneg %p36
        $region26: #{tpu_custom_call.1} parent=23 // pred_check_branch
          %155 = sbr.rel (%p153) target = $region28
        $region27: #{tpu_custom_call.1} parent=23 // pred_region
          %s156 = sand.u32 %s26, 1
          %s157 = scalar_lea.sflag [#allocation3], %s156
          %s158 = sand.u32 %s26, 1
          %s159 = smul.addr %s158, 48
          %s160 = scalar_lea.vmem [#allocation2], %s159
          %s162 = ssub.s32 768, 768
          %163 = vsyncadd %s157, %s162
          %s164 = smul.addr %s16, 6
          %s165 = smul.addr %s164, 128
          %s166 = scalar_lea.hbm %s0, %s165
          %s168 = sshll.u32 %s160, 4
          %s169 = int_to_ptr.vmem [resolvable:$true] %s168
          %171 = dma.hbm_to_vmem [thread:$0]  %s166, 768, %s169, %s157
        $region28: #{tpu_custom_call.1} parent=23 // pred_fallthru
          _
      $region24: #{tpu_custom_call.1} parent=5 // pred_fallthru
        _
      %p172 = scmp.le.s32.totalorder 1, %s16
      %p173 = scmp.lt.s32.totalorder %s16, 3
      %p174 = pnand %p172, %p173
      %p175 = pneg %p174
      // Predicated region
      $region29: #{tpu_custom_call.1} parent=5 // pred_check
        _
      $region30: #{tpu_custom_call.1} parent=5 // pred_check_branch
        %177 = sbr.rel (%p174) target = $region32
      $region31: #{tpu_custom_call.1} parent=5 // pred_region
        %s178 = ssub.s32 %s16, 1
        %s179 = sand.u32 %s29, 1
        %s180 = scalar_lea.sflag [#allocation3], %s179
        %s181 = sand.u32 %s29, 1
        %s182 = smul.addr %s181, 48
        %s183 = scalar_lea.vmem [#allocation2], %s182
        // Predicated region
        $region33: #{tpu_custom_call.1} parent=31 // pred_check
          %p184 = pneg %p42
        $region34: #{tpu_custom_call.1} parent=31 // pred_check_branch
          %186 = sbr.rel (%p184) target = $region36
        $region35: #{tpu_custom_call.1} parent=31 // pred_region
          %187 = dma.done %s180, 768
        $region36: #{tpu_custom_call.1} parent=31 // pred_fallthru
          _
        // Predicated region
        $region37: #{tpu_custom_call.1} parent=31 // pred_check
          %p188 = pneg %p63
        $region38: #{tpu_custom_call.1} parent=31 // pred_check_branch
          %190 = sbr.rel (%p188) target = $region40
        $region39: #{tpu_custom_call.1} parent=31 // pred_region
          %191 = dma.done [#allocation6], 49152
        $region40: #{tpu_custom_call.1} parent=31 // pred_fallthru
          _
        // Predicated region
        $region41: #{tpu_custom_call.1} parent=31 // pred_check
          %p192 = pneg %p84
        $region42: #{tpu_custom_call.1} parent=31 // pred_check_branch
          %194 = sbr.rel (%p192) target = $region44
        $region43: #{tpu_custom_call.1} parent=31 // pred_region
          %195 = dma.done [#allocation6], 64
        $region44: #{tpu_custom_call.1} parent=31 // pred_fallthru
          _
        %s196 = sand.u32 %s29, 1
        %s197 = scalar_lea.sflag [#allocation3], %s196
        %s198 = sand.u32 %s29, 1
        %s199 = smul.addr %s198, 48
        %s200 = scalar_lea.vmem [#allocation2], %s199
        %p201 = pneg %p42
        %p202 = pneg %p39
        %p203 = pneg %p63
        %p204 = pneg %p60
        %p205 = pneg %p84
        %p206 = pneg %p81
        %p207 = pneg %p110
        %p208 = pneg %p107
        %s209 = sand.u32 %s97, 1
        %s210 = scalar_lea.sflag [#allocation4], %s209
        %s211 = sand.u32 %s97, 1
        %s212 = smul.addr %s211, 32
        %s213 = scalar_lea.vmem [#allocation8], %s212
        %v214 = vld [vmem:[%s183] sm:$0xff]
        %v215 = vld [vmem:[%s183 + $0x8] sm:$0xff]
        %v216 = vld [vmem:[%s183 + $0x10] sm:$0xff]
        %v217 = vld [vmem:[%s183 + $0x18] sm:$0xff]
        %v218 = vld [vmem:[%s183 + $0x20] sm:$0xff]
        %v219 = vld [vmem:[%s183 + $0x28] sm:$0xff]
        %v220 = vld [vmem:[#allocation5] sm:$0xff]
        %v221 = vld [vmem:[#allocation5 + $0x8] sm:$0xff]
        %v222 = vld [vmem:[#allocation5 + $0x10] sm:$0xff]
        %v223 = vld [vmem:[#allocation5 + $0x18] sm:$0xff]
        %v224 = vld [vmem:[#allocation5 + $0x20] sm:$0xff]
        %v225 = vld [vmem:[#allocation5 + $0x28] sm:$0xff]
        %v226 = vld [vmem:[#allocation5 + $0x30] sm:$0xff]
        %v227 = vld [vmem:[#allocation5 + $0x38] sm:$0xff]
        %v228 = vld [vmem:[#allocation5 + $0x40] sm:$0xff]
        %v229 = vld [vmem:[#allocation5 + $0x48] sm:$0xff]
        %v230 = vld [vmem:[#allocation5 + $0x50] sm:$0xff]
        %v231 = vld [vmem:[#allocation5 + $0x58] sm:$0xff]
        %v232 = vld [vmem:[#allocation5 + $0x60] sm:$0xff]
        %v233 = vld [vmem:[#allocation5 + $0x68] sm:$0xff]
        %v234 = vld [vmem:[#allocation5 + $0x70] sm:$0xff]
        %v235 = vld [vmem:[#allocation5 + $0x78] sm:$0xff]
        %v236 = vld [vmem:[#allocation5 + $0x80] sm:$0xff]
        %v237 = vld [vmem:[#allocation5 + $0x88] sm:$0xff]
        %v238 = vld [vmem:[#allocation5 + $0x90] sm:$0xff]
        %v239 = vld [vmem:[#allocation5 + $0x98] sm:$0xff]
        %v240 = vld [vmem:[#allocation5 + $0xa0] sm:$0xff]
        %v241 = vld [vmem:[#allocation5 + $0xa8] sm:$0xff]
        %v242 = vld [vmem:[#allocation5 + $0xb0] sm:$0xff]
        %v243 = vld [vmem:[#allocation5 + $0xb8] sm:$0xff]
        %v244 = vld [vmem:[#allocation5 + $0xc0] sm:$0xff]
        %v245 = vld [vmem:[#allocation5 + $0xc8] sm:$0xff]
        %v246 = vld [vmem:[#allocation5 + $0xd0] sm:$0xff]
        %v247 = vld [vmem:[#allocation5 + $0xd8] sm:$0xff]
        %v248 = vld [vmem:[#allocation5 + $0xe0] sm:$0xff]
        %v249 = vld [vmem:[#allocation5 + $0xe8] sm:$0xff]
        %v250 = vld [vmem:[#allocation5 + $0xf0] sm:$0xff]
        %v251 = vld [vmem:[#allocation5 + $0xf8] sm:$0xff]
        %v252 = vld [vmem:[#allocation5 + $0x100] sm:$0xff]
        %v253 = vld [vmem:[#allocation5 + $0x108] sm:$0xff]
        %v254 = vld [vmem:[#allocation5 + $0x110] sm:$0xff]
        %v255 = vld [vmem:[#allocation5 + $0x118] sm:$0xff]
        %v256 = vld [vmem:[#allocation5 + $0x120] sm:$0xff]
        %v257 = vld [vmem:[#allocation5 + $0x128] sm:$0xff]
        %v258 = vld [vmem:[#allocation5 + $0x130] sm:$0xff]
        %v259 = vld [vmem:[#allocation5 + $0x138] sm:$0xff]
        %v260 = vld [vmem:[#allocation5 + $0x140] sm:$0xff]
        %v261 = vld [vmem:[#allocation5 + $0x148] sm:$0xff]
        %v262 = vld [vmem:[#allocation5 + $0x150] sm:$0xff]
        %v263 = vld [vmem:[#allocation5 + $0x158] sm:$0xff]
        %v264 = vld [vmem:[#allocation5 + $0x160] sm:$0xff]
        %v265 = vld [vmem:[#allocation5 + $0x168] sm:$0xff]
        %v266 = vld [vmem:[#allocation5 + $0x170] sm:$0xff]
        %v267 = vld [vmem:[#allocation5 + $0x178] sm:$0xff]
        %v268 = vld [vmem:[#allocation5 + $0x180] sm:$0xff]
        %v269 = vld [vmem:[#allocation5 + $0x188] sm:$0xff]
        %v270 = vld [vmem:[#allocation5 + $0x190] sm:$0xff]
        %v271 = vld [vmem:[#allocation5 + $0x198] sm:$0xff]
        %v272 = vld [vmem:[#allocation5 + $0x1a0] sm:$0xff]
        %v273 = vld [vmem:[#allocation5 + $0x1a8] sm:$0xff]
        %v274 = vld [vmem:[#allocation5 + $0x1b0] sm:$0xff]
        %v275 = vld [vmem:[#allocation5 + $0x1b8] sm:$0xff]
        %v276 = vld [vmem:[#allocation5 + $0x1c0] sm:$0xff]
        %v277 = vld [vmem:[#allocation5 + $0x1c8] sm:$0xff]
        %v278 = vld [vmem:[#allocation5 + $0x1d0] sm:$0xff]
        %v279 = vld [vmem:[#allocation5 + $0x1d8] sm:$0xff]
        %v280 = vld [vmem:[#allocation5 + $0x1e0] sm:$0xff]
        %v281 = vld [vmem:[#allocation5 + $0x1e8] sm:$0xff]
        %v282 = vld [vmem:[#allocation5 + $0x1f0] sm:$0xff]
        %v283 = vld [vmem:[#allocation5 + $0x1f8] sm:$0xff]
        %v284 = vld [vmem:[#allocation5 + $0x200] sm:$0xff]
        %v285 = vld [vmem:[#allocation5 + $0x208] sm:$0xff]
        %v286 = vld [vmem:[#allocation5 + $0x210] sm:$0xff]
        %v287 = vld [vmem:[#allocation5 + $0x218] sm:$0xff]
        %v288 = vld [vmem:[#allocation5 + $0x220] sm:$0xff]
        %v289 = vld [vmem:[#allocation5 + $0x228] sm:$0xff]
        %v290 = vld [vmem:[#allocation5 + $0x230] sm:$0xff]
        %v291 = vld [vmem:[#allocation5 + $0x238] sm:$0xff]
        %v292 = vld [vmem:[#allocation5 + $0x240] sm:$0xff]
        %v293 = vld [vmem:[#allocation5 + $0x248] sm:$0xff]
        %v294 = vld [vmem:[#allocation5 + $0x250] sm:$0xff]
        %v295 = vld [vmem:[#allocation5 + $0x258] sm:$0xff]
        %v296 = vld [vmem:[#allocation5 + $0x260] sm:$0xff]
        %v297 = vld [vmem:[#allocation5 + $0x268] sm:$0xff]
        %v298 = vld [vmem:[#allocation5 + $0x270] sm:$0xff]
        %v299 = vld [vmem:[#allocation5 + $0x278] sm:$0xff]
        %v300 = vld [vmem:[#allocation5 + $0x280] sm:$0xff]
        %v301 = vld [vmem:[#allocation5 + $0x288] sm:$0xff]
        %v302 = vld [vmem:[#allocation5 + $0x290] sm:$0xff]
        %v303 = vld [vmem:[#allocation5 + $0x298] sm:$0xff]
        %v304 = vld [vmem:[#allocation5 + $0x2a0] sm:$0xff]
        %v305 = vld [vmem:[#allocation5 + $0x2a8] sm:$0xff]
        %v306 = vld [vmem:[#allocation5 + $0x2b0] sm:$0xff]
        %v307 = vld [vmem:[#allocation5 + $0x2b8] sm:$0xff]
        %v308 = vld [vmem:[#allocation5 + $0x2c0] sm:$0xff]
        %v309 = vld [vmem:[#allocation5 + $0x2c8] sm:$0xff]
        %v310 = vld [vmem:[#allocation5 + $0x2d0] sm:$0xff]
        %v311 = vld [vmem:[#allocation5 + $0x2d8] sm:$0xff]
        %v312 = vld [vmem:[#allocation5 + $0x2e0] sm:$0xff]
        %v313 = vld [vmem:[#allocation5 + $0x2e8] sm:$0xff]
        %v314 = vld [vmem:[#allocation5 + $0x2f0] sm:$0xff]
        %v315 = vld [vmem:[#allocation5 + $0x2f8] sm:$0xff]
        %v316 = vld [vmem:[#allocation5 + $0x300] sm:$0xff]
        %v317 = vld [vmem:[#allocation5 + $0x308] sm:$0xff]
        %v318 = vld [vmem:[#allocation5 + $0x310] sm:$0xff]
        %v319 = vld [vmem:[#allocation5 + $0x318] sm:$0xff]
        %v320 = vld [vmem:[#allocation5 + $0x320] sm:$0xff]
        %v321 = vld [vmem:[#allocation5 + $0x328] sm:$0xff]
        %v322 = vld [vmem:[#allocation5 + $0x330] sm:$0xff]
        %v323 = vld [vmem:[#allocation5 + $0x338] sm:$0xff]
        %v324 = vld [vmem:[#allocation5 + $0x340] sm:$0xff]
        %v325 = vld [vmem:[#allocation5 + $0x348] sm:$0xff]
        %v326 = vld [vmem:[#allocation5 + $0x350] sm:$0xff]
        %v327 = vld [vmem:[#allocation5 + $0x358] sm:$0xff]
        %v328 = vld [vmem:[#allocation5 + $0x360] sm:$0xff]
        %v329 = vld [vmem:[#allocation5 + $0x368] sm:$0xff]
        %v330 = vld [vmem:[#allocation5 + $0x370] sm:$0xff]
        %v331 = vld [vmem:[#allocation5 + $0x378] sm:$0xff]
        %v332 = vld [vmem:[#allocation5 + $0x380] sm:$0xff]
        %v333 = vld [vmem:[#allocation5 + $0x388] sm:$0xff]
        %v334 = vld [vmem:[#allocation5 + $0x390] sm:$0xff]
        %v335 = vld [vmem:[#allocation5 + $0x398] sm:$0xff]
        %v336 = vld [vmem:[#allocation5 + $0x3a0] sm:$0xff]
        %v337 = vld [vmem:[#allocation5 + $0x3a8] sm:$0xff]
        %v338 = vld [vmem:[#allocation5 + $0x3b0] sm:$0xff]
        %v339 = vld [vmem:[#allocation5 + $0x3b8] sm:$0xff]
        %v340 = vld [vmem:[#allocation5 + $0x3c0] sm:$0xff]
        %v341 = vld [vmem:[#allocation5 + $0x3c8] sm:$0xff]
        %v342 = vld [vmem:[#allocation5 + $0x3d0] sm:$0xff]
        %v343 = vld [vmem:[#allocation5 + $0x3d8] sm:$0xff]
        %v344 = vld [vmem:[#allocation5 + $0x3e0] sm:$0xff]
        %v345 = vld [vmem:[#allocation5 + $0x3e8] sm:$0xff]
        %v346 = vld [vmem:[#allocation5 + $0x3f0] sm:$0xff]
        %v347 = vld [vmem:[#allocation5 + $0x3f8] sm:$0xff]
        %v348 = vld [vmem:[#allocation5 + $0x400] sm:$0xff]
        %v349 = vld [vmem:[#allocation5 + $0x408] sm:$0xff]
        %v350 = vld [vmem:[#allocation5 + $0x410] sm:$0xff]
        %v351 = vld [vmem:[#allocation5 + $0x418] sm:$0xff]
        %v352 = vld [vmem:[#allocation5 + $0x420] sm:$0xff]
        %v353 = vld [vmem:[#allocation5 + $0x428] sm:$0xff]
        %v354 = vld [vmem:[#allocation5 + $0x430] sm:$0xff]
        %v355 = vld [vmem:[#allocation5 + $0x438] sm:$0xff]
        %v356 = vld [vmem:[#allocation5 + $0x440] sm:$0xff]
        %v357 = vld [vmem:[#allocation5 + $0x448] sm:$0xff]
        %v358 = vld [vmem:[#allocation5 + $0x450] sm:$0xff]
        %v359 = vld [vmem:[#allocation5 + $0x458] sm:$0xff]
        %v360 = vld [vmem:[#allocation5 + $0x460] sm:$0xff]
        %v361 = vld [vmem:[#allocation5 + $0x468] sm:$0xff]
        %v362 = vld [vmem:[#allocation5 + $0x470] sm:$0xff]
        %v363 = vld [vmem:[#allocation5 + $0x478] sm:$0xff]
        %v364 = vld [vmem:[#allocation5 + $0x480] sm:$0xff]
        %v365 = vld [vmem:[#allocation5 + $0x488] sm:$0xff]
        %v366 = vld [vmem:[#allocation5 + $0x490] sm:$0xff]
        %v367 = vld [vmem:[#allocation5 + $0x498] sm:$0xff]
        %v368 = vld [vmem:[#allocation5 + $0x4a0] sm:$0xff]
        %v369 = vld [vmem:[#allocation5 + $0x4a8] sm:$0xff]
        %v370 = vld [vmem:[#allocation5 + $0x4b0] sm:$0xff]
        %v371 = vld [vmem:[#allocation5 + $0x4b8] sm:$0xff]
        %v372 = vld [vmem:[#allocation5 + $0x4c0] sm:$0xff]
        %v373 = vld [vmem:[#allocation5 + $0x4c8] sm:$0xff]
        %v374 = vld [vmem:[#allocation5 + $0x4d0] sm:$0xff]
        %v375 = vld [vmem:[#allocation5 + $0x4d8] sm:$0xff]
        %v376 = vld [vmem:[#allocation5 + $0x4e0] sm:$0xff]
        %v377 = vld [vmem:[#allocation5 + $0x4e8] sm:$0xff]
        %v378 = vld [vmem:[#allocation5 + $0x4f0] sm:$0xff]
        %v379 = vld [vmem:[#allocation5 + $0x4f8] sm:$0xff]
        %v380 = vld [vmem:[#allocation5 + $0x500] sm:$0xff]
        %v381 = vld [vmem:[#allocation5 + $0x508] sm:$0xff]
        %v382 = vld [vmem:[#allocation5 + $0x510] sm:$0xff]
        %v383 = vld [vmem:[#allocation5 + $0x518] sm:$0xff]
        %v384 = vld [vmem:[#allocation5 + $0x520] sm:$0xff]
        %v385 = vld [vmem:[#allocation5 + $0x528] sm:$0xff]
        %v386 = vld [vmem:[#allocation5 + $0x530] sm:$0xff]
        %v387 = vld [vmem:[#allocation5 + $0x538] sm:$0xff]
        %v388 = vld [vmem:[#allocation5 + $0x540] sm:$0xff]
        %v389 = vld [vmem:[#allocation5 + $0x548] sm:$0xff]
        %v390 = vld [vmem:[#allocation5 + $0x550] sm:$0xff]
        %v391 = vld [vmem:[#allocation5 + $0x558] sm:$0xff]
        %v392 = vld [vmem:[#allocation5 + $0x560] sm:$0xff]
        %v393 = vld [vmem:[#allocation5 + $0x568] sm:$0xff]
        %v394 = vld [vmem:[#allocation5 + $0x570] sm:$0xff]
        %v395 = vld [vmem:[#allocation5 + $0x578] sm:$0xff]
        %v396 = vld [vmem:[#allocation5 + $0x580] sm:$0xff]
        %v397 = vld [vmem:[#allocation5 + $0x588] sm:$0xff]
        %v398 = vld [vmem:[#allocation5 + $0x590] sm:$0xff]
        %v399 = vld [vmem:[#allocation5 + $0x598] sm:$0xff]
        %v400 = vld [vmem:[#allocation5 + $0x5a0] sm:$0xff]
        %v401 = vld [vmem:[#allocation5 + $0x5a8] sm:$0xff]
        %v402 = vld [vmem:[#allocation5 + $0x5b0] sm:$0xff]
        %v403 = vld [vmem:[#allocation5 + $0x5b8] sm:$0xff]
        %v404 = vld [vmem:[#allocation5 + $0x5c0] sm:$0xff]
        %v405 = vld [vmem:[#allocation5 + $0x5c8] sm:$0xff]
        %v406 = vld [vmem:[#allocation5 + $0x5d0] sm:$0xff]
        %v407 = vld [vmem:[#allocation5 + $0x5d8] sm:$0xff]
        %v408 = vld [vmem:[#allocation5 + $0x5e0] sm:$0xff]
        %v409 = vld [vmem:[#allocation5 + $0x5e8] sm:$0xff]
        %v410 = vld [vmem:[#allocation5 + $0x5f0] sm:$0xff]
        %v411 = vld [vmem:[#allocation5 + $0x5f8] sm:$0xff]
        %v412 = vld [vmem:[#allocation5 + $0x600] sm:$0xff]
        %v413 = vld [vmem:[#allocation5 + $0x608] sm:$0xff]
        %v414 = vld [vmem:[#allocation5 + $0x610] sm:$0xff]
        %v415 = vld [vmem:[#allocation5 + $0x618] sm:$0xff]
        %v416 = vld [vmem:[#allocation5 + $0x620] sm:$0xff]
        %v417 = vld [vmem:[#allocation5 + $0x628] sm:$0xff]
        %v418 = vld [vmem:[#allocation5 + $0x630] sm:$0xff]
        %v419 = vld [vmem:[#allocation5 + $0x638] sm:$0xff]
        %v420 = vld [vmem:[#allocation5 + $0x640] sm:$0xff]
        %v421 = vld [vmem:[#allocation5 + $0x648] sm:$0xff]
        %v422 = vld [vmem:[#allocation5 + $0x650] sm:$0xff]
        %v423 = vld [vmem:[#allocation5 + $0x658] sm:$0xff]
        %v424 = vld [vmem:[#allocation5 + $0x660] sm:$0xff]
        %v425 = vld [vmem:[#allocation5 + $0x668] sm:$0xff]
        %v426 = vld [vmem:[#allocation5 + $0x670] sm:$0xff]
        %v427 = vld [vmem:[#allocation5 + $0x678] sm:$0xff]
        %v428 = vld [vmem:[#allocation5 + $0x680] sm:$0xff]
        %v429 = vld [vmem:[#allocation5 + $0x688] sm:$0xff]
        %v430 = vld [vmem:[#allocation5 + $0x690] sm:$0xff]
        %v431 = vld [vmem:[#allocation5 + $0x698] sm:$0xff]
        %v432 = vld [vmem:[#allocation5 + $0x6a0] sm:$0xff]
        %v433 = vld [vmem:[#allocation5 + $0x6a8] sm:$0xff]
        %v434 = vld [vmem:[#allocation5 + $0x6b0] sm:$0xff]
        %v435 = vld [vmem:[#allocation5 + $0x6b8] sm:$0xff]
        %v436 = vld [vmem:[#allocation5 + $0x6c0] sm:$0xff]
        %v437 = vld [vmem:[#allocation5 + $0x6c8] sm:$0xff]
        %v438 = vld [vmem:[#allocation5 + $0x6d0] sm:$0xff]
        %v439 = vld [vmem:[#allocation5 + $0x6d8] sm:$0xff]
        %v440 = vld [vmem:[#allocation5 + $0x6e0] sm:$0xff]
        %v441 = vld [vmem:[#allocation5 + $0x6e8] sm:$0xff]
        %v442 = vld [vmem:[#allocation5 + $0x6f0] sm:$0xff]
        %v443 = vld [vmem:[#allocation5 + $0x6f8] sm:$0xff]
        %v444 = vld [vmem:[#allocation5 + $0x700] sm:$0xff]
        %v445 = vld [vmem:[#allocation5 + $0x708] sm:$0xff]
        %v446 = vld [vmem:[#allocation5 + $0x710] sm:$0xff]
        %v447 = vld [vmem:[#allocation5 + $0x718] sm:$0xff]
        %v448 = vld [vmem:[#allocation5 + $0x720] sm:$0xff]
        %v449 = vld [vmem:[#allocation5 + $0x728] sm:$0xff]
        %v450 = vld [vmem:[#allocation5 + $0x730] sm:$0xff]
        %v451 = vld [vmem:[#allocation5 + $0x738] sm:$0xff]
        %v452 = vld [vmem:[#allocation5 + $0x740] sm:$0xff]
        %v453 = vld [vmem:[#allocation5 + $0x748] sm:$0xff]
        %v454 = vld [vmem:[#allocation5 + $0x750] sm:$0xff]
        %v455 = vld [vmem:[#allocation5 + $0x758] sm:$0xff]
        %v456 = vld [vmem:[#allocation5 + $0x760] sm:$0xff]
        %v457 = vld [vmem:[#allocation5 + $0x768] sm:$0xff]
        %v458 = vld [vmem:[#allocation5 + $0x770] sm:$0xff]
        %v459 = vld [vmem:[#allocation5 + $0x778] sm:$0xff]
        %v460 = vld [vmem:[#allocation5 + $0x780] sm:$0xff]
        %v461 = vld [vmem:[#allocation5 + $0x788] sm:$0xff]
        %v462 = vld [vmem:[#allocation5 + $0x790] sm:$0xff]
        %v463 = vld [vmem:[#allocation5 + $0x798] sm:$0xff]
        %v464 = vld [vmem:[#allocation5 + $0x7a0] sm:$0xff]
        %v465 = vld [vmem:[#allocation5 + $0x7a8] sm:$0xff]
        %v466 = vld [vmem:[#allocation5 + $0x7b0] sm:$0xff]
        %v467 = vld [vmem:[#allocation5 + $0x7b8] sm:$0xff]
        %v468 = vld [vmem:[#allocation5 + $0x7c0] sm:$0xff]
        %v469 = vld [vmem:[#allocation5 + $0x7c8] sm:$0xff]
        %v470 = vld [vmem:[#allocation5 + $0x7d0] sm:$0xff]
        %v471 = vld [vmem:[#allocation5 + $0x7d8] sm:$0xff]
        %v472 = vld [vmem:[#allocation5 + $0x7e0] sm:$0xff]
        %v473 = vld [vmem:[#allocation5 + $0x7e8] sm:$0xff]
        %v474 = vld [vmem:[#allocation5 + $0x7f0] sm:$0xff]
        %v475 = vld [vmem:[#allocation5 + $0x7f8] sm:$0xff]
        %v476 = vld [vmem:[#allocation5 + $0x800] sm:$0xff]
        %v477 = vld [vmem:[#allocation5 + $0x808] sm:$0xff]
        %v478 = vld [vmem:[#allocation5 + $0x810] sm:$0xff]
        %v479 = vld [vmem:[#allocation5 + $0x818] sm:$0xff]
        %v480 = vld [vmem:[#allocation5 + $0x820] sm:$0xff]
        %v481 = vld [vmem:[#allocation5 + $0x828] sm:$0xff]
        %v482 = vld [vmem:[#allocation5 + $0x830] sm:$0xff]
        %v483 = vld [vmem:[#allocation5 + $0x838] sm:$0xff]
        %v484 = vld [vmem:[#allocation5 + $0x840] sm:$0xff]
        %v485 = vld [vmem:[#allocation5 + $0x848] sm:$0xff]
        %v486 = vld [vmem:[#allocation5 + $0x850] sm:$0xff]
        %v487 = vld [vmem:[#allocation5 + $0x858] sm:$0xff]
        %v488 = vld [vmem:[#allocation5 + $0x860] sm:$0xff]
        %v489 = vld [vmem:[#allocation5 + $0x868] sm:$0xff]
        %v490 = vld [vmem:[#allocation5 + $0x870] sm:$0xff]
        %v491 = vld [vmem:[#allocation5 + $0x878] sm:$0xff]
        %v492 = vld [vmem:[#allocation5 + $0x880] sm:$0xff]
        %v493 = vld [vmem:[#allocation5 + $0x888] sm:$0xff]
        %v494 = vld [vmem:[#allocation5 + $0x890] sm:$0xff]
        %v495 = vld [vmem:[#allocation5 + $0x898] sm:$0xff]
        %v496 = vld [vmem:[#allocation5 + $0x8a0] sm:$0xff]
        %v497 = vld [vmem:[#allocation5 + $0x8a8] sm:$0xff]
        %v498 = vld [vmem:[#allocation5 + $0x8b0] sm:$0xff]
        %v499 = vld [vmem:[#allocation5 + $0x8b8] sm:$0xff]
        %v500 = vld [vmem:[#allocation5 + $0x8c0] sm:$0xff]
        %v501 = vld [vmem:[#allocation5 + $0x8c8] sm:$0xff]
        %v502 = vld [vmem:[#allocation5 + $0x8d0] sm:$0xff]
        %v503 = vld [vmem:[#allocation5 + $0x8d8] sm:$0xff]
        %v504 = vld [vmem:[#allocation5 + $0x8e0] sm:$0xff]
        %v505 = vld [vmem:[#allocation5 + $0x8e8] sm:$0xff]
        %v506 = vld [vmem:[#allocation5 + $0x8f0] sm:$0xff]
        %v507 = vld [vmem:[#allocation5 + $0x8f8] sm:$0xff]
        %v508 = vld [vmem:[#allocation5 + $0x900] sm:$0xff]
        %v509 = vld [vmem:[#allocation5 + $0x908] sm:$0xff]
        %v510 = vld [vmem:[#allocation5 + $0x910] sm:$0xff]
        %v511 = vld [vmem:[#allocation5 + $0x918] sm:$0xff]
        %v512 = vld [vmem:[#allocation5 + $0x920] sm:$0xff]
        %v513 = vld [vmem:[#allocation5 + $0x928] sm:$0xff]
        %v514 = vld [vmem:[#allocation5 + $0x930] sm:$0xff]
        %v515 = vld [vmem:[#allocation5 + $0x938] sm:$0xff]
        %v516 = vld [vmem:[#allocation5 + $0x940] sm:$0xff]
        %v517 = vld [vmem:[#allocation5 + $0x948] sm:$0xff]
        %v518 = vld [vmem:[#allocation5 + $0x950] sm:$0xff]
        %v519 = vld [vmem:[#allocation5 + $0x958] sm:$0xff]
        %v520 = vld [vmem:[#allocation5 + $0x960] sm:$0xff]
        %v521 = vld [vmem:[#allocation5 + $0x968] sm:$0xff]
        %v522 = vld [vmem:[#allocation5 + $0x970] sm:$0xff]
        %v523 = vld [vmem:[#allocation5 + $0x978] sm:$0xff]
        %v524 = vld [vmem:[#allocation5 + $0x980] sm:$0xff]
        %v525 = vld [vmem:[#allocation5 + $0x988] sm:$0xff]
        %v526 = vld [vmem:[#allocation5 + $0x990] sm:$0xff]
        %v527 = vld [vmem:[#allocation5 + $0x998] sm:$0xff]
        %v528 = vld [vmem:[#allocation5 + $0x9a0] sm:$0xff]
        %v529 = vld [vmem:[#allocation5 + $0x9a8] sm:$0xff]
        %v530 = vld [vmem:[#allocation5 + $0x9b0] sm:$0xff]
        %v531 = vld [vmem:[#allocation5 + $0x9b8] sm:$0xff]
        %v532 = vld [vmem:[#allocation5 + $0x9c0] sm:$0xff]
        %v533 = vld [vmem:[#allocation5 + $0x9c8] sm:$0xff]
        %v534 = vld [vmem:[#allocation5 + $0x9d0] sm:$0xff]
        %v535 = vld [vmem:[#allocation5 + $0x9d8] sm:$0xff]
        %v536 = vld [vmem:[#allocation5 + $0x9e0] sm:$0xff]
        %v537 = vld [vmem:[#allocation5 + $0x9e8] sm:$0xff]
        %v538 = vld [vmem:[#allocation5 + $0x9f0] sm:$0xff]
        %v539 = vld [vmem:[#allocation5 + $0x9f8] sm:$0xff]
        %v540 = vld [vmem:[#allocation5 + $0xa00] sm:$0xff]
        %v541 = vld [vmem:[#allocation5 + $0xa08] sm:$0xff]
        %v542 = vld [vmem:[#allocation5 + $0xa10] sm:$0xff]
        %v543 = vld [vmem:[#allocation5 + $0xa18] sm:$0xff]
        %v544 = vld [vmem:[#allocation5 + $0xa20] sm:$0xff]
        %v545 = vld [vmem:[#allocation5 + $0xa28] sm:$0xff]
        %v546 = vld [vmem:[#allocation5 + $0xa30] sm:$0xff]
        %v547 = vld [vmem:[#allocation5 + $0xa38] sm:$0xff]
        %v548 = vld [vmem:[#allocation5 + $0xa40] sm:$0xff]
        %v549 = vld [vmem:[#allocation5 + $0xa48] sm:$0xff]
        %v550 = vld [vmem:[#allocation5 + $0xa50] sm:$0xff]
        %v551 = vld [vmem:[#allocation5 + $0xa58] sm:$0xff]
        %v552 = vld [vmem:[#allocation5 + $0xa60] sm:$0xff]
        %v553 = vld [vmem:[#allocation5 + $0xa68] sm:$0xff]
        %v554 = vld [vmem:[#allocation5 + $0xa70] sm:$0xff]
        %v555 = vld [vmem:[#allocation5 + $0xa78] sm:$0xff]
        %v556 = vld [vmem:[#allocation5 + $0xa80] sm:$0xff]
        %v557 = vld [vmem:[#allocation5 + $0xa88] sm:$0xff]
        %v558 = vld [vmem:[#allocation5 + $0xa90] sm:$0xff]
        %v559 = vld [vmem:[#allocation5 + $0xa98] sm:$0xff]
        %v560 = vld [vmem:[#allocation5 + $0xaa0] sm:$0xff]
        %v561 = vld [vmem:[#allocation5 + $0xaa8] sm:$0xff]
        %v562 = vld [vmem:[#allocation5 + $0xab0] sm:$0xff]
        %v563 = vld [vmem:[#allocation5 + $0xab8] sm:$0xff]
        %v564 = vld [vmem:[#allocation5 + $0xac0] sm:$0xff]
        %v565 = vld [vmem:[#allocation5 + $0xac8] sm:$0xff]
        %v566 = vld [vmem:[#allocation5 + $0xad0] sm:$0xff]
        %v567 = vld [vmem:[#allocation5 + $0xad8] sm:$0xff]
        %v568 = vld [vmem:[#allocation5 + $0xae0] sm:$0xff]
        %v569 = vld [vmem:[#allocation5 + $0xae8] sm:$0xff]
        %v570 = vld [vmem:[#allocation5 + $0xaf0] sm:$0xff]
        %v571 = vld [vmem:[#allocation5 + $0xaf8] sm:$0xff]
        %v572 = vld [vmem:[#allocation5 + $0xb00] sm:$0xff]
        %v573 = vld [vmem:[#allocation5 + $0xb08] sm:$0xff]
        %v574 = vld [vmem:[#allocation5 + $0xb10] sm:$0xff]
        %v575 = vld [vmem:[#allocation5 + $0xb18] sm:$0xff]
        %v576 = vld [vmem:[#allocation5 + $0xb20] sm:$0xff]
        %v577 = vld [vmem:[#allocation5 + $0xb28] sm:$0xff]
        %v578 = vld [vmem:[#allocation5 + $0xb30] sm:$0xff]
        %v579 = vld [vmem:[#allocation5 + $0xb38] sm:$0xff]
        %v580 = vld [vmem:[#allocation5 + $0xb40] sm:$0xff]
        %v581 = vld [vmem:[#allocation5 + $0xb48] sm:$0xff]
        %v582 = vld [vmem:[#allocation5 + $0xb50] sm:$0xff]
        %v583 = vld [vmem:[#allocation5 + $0xb58] sm:$0xff]
        %v584 = vld [vmem:[#allocation5 + $0xb60] sm:$0xff]
        %v585 = vld [vmem:[#allocation5 + $0xb68] sm:$0xff]
        %v586 = vld [vmem:[#allocation5 + $0xb70] sm:$0xff]
        %v587 = vld [vmem:[#allocation5 + $0xb78] sm:$0xff]
        %v588 = vld [vmem:[#allocation5 + $0xb80] sm:$0xff]
        %v589 = vld [vmem:[#allocation5 + $0xb88] sm:$0xff]
        %v590 = vld [vmem:[#allocation5 + $0xb90] sm:$0xff]
        %v591 = vld [vmem:[#allocation5 + $0xb98] sm:$0xff]
        %v592 = vld [vmem:[#allocation5 + $0xba0] sm:$0xff]
        %v593 = vld [vmem:[#allocation5 + $0xba8] sm:$0xff]
        %v594 = vld [vmem:[#allocation5 + $0xbb0] sm:$0xff]
        %v595 = vld [vmem:[#allocation5 + $0xbb8] sm:$0xff]
        %v596 = vld [vmem:[#allocation5 + $0xbc0] sm:$0xff]
        %v597 = vld [vmem:[#allocation5 + $0xbc8] sm:$0xff]
        %v598 = vld [vmem:[#allocation5 + $0xbd0] sm:$0xff]
        %v599 = vld [vmem:[#allocation5 + $0xbd8] sm:$0xff]
        %v600 = vld [vmem:[#allocation5 + $0xbe0] sm:$0xff]
        %v601 = vld [vmem:[#allocation5 + $0xbe8] sm:$0xff]
        %v602 = vld [vmem:[#allocation5 + $0xbf0] sm:$0xff]
        %v603 = vld [vmem:[#allocation5 + $0xbf8] sm:$0xff]
        %v604 = vld [vmem:[#allocation7] sm:$0xf]
        %v606 = vlaneseq
        %v607 = vshrl.u32 %v606, 7
        %v608 = vsub.s32 0, %v607
        %v609 = vrot.slane %v604, %v608
        %v610 = vlaneseq
        %v611 = vshrl.u32 %v610, 7
        %v612 = vsub.s32 1, %v611
        %v613 = vrot.slane %v604, %v612
        %v614 = vlaneseq
        %v615 = vshrl.u32 %v614, 7
        %v616 = vsub.s32 2, %v615
        %v617 = vrot.slane %v604, %v616
        %v618 = vlaneseq
        %v619 = vshrl.u32 %v618, 7
        %v620 = vsub.s32 3, %v619
        %v621 = vrot.slane %v604, %v620
        %626 = vmatprep.subr.mxu0 %v281
        %627 = vmatpush1.msra.mxu0 %v280
        %628 = vmatprep.subr.mxu0 %v277
        %629 = vmatpush1.msra.mxu0 %v276
        %630 = vmatprep.subr.mxu0 %v273
        %631 = vmatpush1.msra.mxu0 %v272
        %632 = vmatprep.subr.mxu0 %v269
        %633 = vmatpush1.msra.mxu0 %v268
        %634 = vmatprep.subr.mxu0 %v265
        %635 = vmatpush1.msra.mxu0 %v264
        %636 = vmatprep.subr.mxu0 %v261
        %637 = vmatpush1.msra.mxu0 %v260
        %638 = vmatprep.subr.mxu0 %v257
        %639 = vmatpush1.msra.mxu0 %v256
        %640 = vmatprep.subr.mxu0 %v253
        %641 = vmatpush1.msra.mxu0 %v252
        %642 = vmatprep.subr.mxu0 %v249
        %643 = vmatpush1.msra.mxu0 %v248
        %644 = vmatprep.subr.mxu0 %v245
        %645 = vmatpush1.msra.mxu0 %v244
        %646 = vmatprep.subr.mxu0 %v241
        %647 = vmatpush1.msra.mxu0 %v240
        %648 = vmatprep.subr.mxu0 %v237
        %649 = vmatpush1.msra.mxu0 %v236
        %650 = vmatprep.subr.mxu0 %v233
        %651 = vmatpush1.msra.mxu0 %v232
        %652 = vmatprep.subr.mxu0 %v229
        %653 = vmatpush1.msra.mxu0 %v228
        %654 = vmatprep.subr.mxu0 %v225
        %655 = vmatpush1.msra.mxu0 %v224
        %656 = vmatprep.subr.mxu0 %v221
        %657 = vmatpush1.msra.mxu0 %v220
        %658 = vmatprep.subr.mxu0 %v345
        %659 = vmatpush2.msra.mxu0 %v344
        %660 = vmatprep.subr.mxu0 %v341
        %661 = vmatpush2.msra.mxu0 %v340
        %662 = vmatprep.subr.mxu0 %v337
        %663 = vmatpush2.msra.mxu0 %v336
        %664 = vmatprep.subr.mxu0 %v333
        %665 = vmatpush2.msra.mxu0 %v332
        %666 = vmatprep.subr.mxu0 %v329
        %667 = vmatpush2.msra.mxu0 %v328
        %668 = vmatprep.subr.mxu0 %v325
        %669 = vmatpush2.msra.mxu0 %v324
        %670 = vmatprep.subr.mxu0 %v321
        %671 = vmatpush2.msra.mxu0 %v320
        %672 = vmatprep.subr.mxu0 %v317
        %673 = vmatpush2.msra.mxu0 %v316
        %674 = vmatprep.subr.mxu0 %v313
        %675 = vmatpush2.msra.mxu0 %v312
        %676 = vmatprep.subr.mxu0 %v309
        %677 = vmatpush2.msra.mxu0 %v308
        %678 = vmatprep.subr.mxu0 %v305
        %679 = vmatpush2.msra.mxu0 %v304
        %680 = vmatprep.subr.mxu0 %v301
        %681 = vmatpush2.msra.mxu0 %v300
        %682 = vmatprep.subr.mxu0 %v297
        %683 = vmatpush2.msra.mxu0 %v296
        %684 = vmatprep.subr.mxu0 %v293
        %685 = vmatpush2.msra.mxu0 %v292
        %686 = vmatprep.subr.mxu0 %v289
        %687 = vmatpush2.msra.mxu0 %v288
        %688 = vmatprep.subr.mxu0 %v285
        %689 = vmatpush2.msra.mxu0 %v284
        %690 = vmatprep.mubr.f32.mxu0 %v215
        %691 = vmatmul.mubr.f32.gmra.mxu0 %v214
        %v692 = vpop.f32.mrf.mxu0
        %v693 = vadd.f32 %v609, %v692
        %v694 = vpop.f32.mrf.mxu0
        %v695 = vadd.f32 %v613, %v694
        %696 = vdwg.mxu0
        %697 = vmatprep.subr.mxu0 %v409
        %698 = vmatpush1.msra.mxu0 %v408
        %699 = vmatprep.subr.mxu0 %v405
        %700 = vmatpush1.msra.mxu0 %v404
        %701 = vmatprep.subr.mxu0 %v401
        %702 = vmatpush1.msra.mxu0 %v400
        %703 = vmatprep.subr.mxu0 %v397
        %704 = vmatpush1.msra.mxu0 %v396
        %705 = vmatprep.subr.mxu0 %v393
        %706 = vmatpush1.msra.mxu0 %v392
        %707 = vmatprep.subr.mxu0 %v389
        %708 = vmatpush1.msra.mxu0 %v388
        %709 = vmatprep.subr.mxu0 %v385
        %710 = vmatpush1.msra.mxu0 %v384
        %711 = vmatprep.subr.mxu0 %v381
        %712 = vmatpush1.msra.mxu0 %v380
        %713 = vmatprep.subr.mxu0 %v377
        %714 = vmatpush1.msra.mxu0 %v376
        %715 = vmatprep.subr.mxu0 %v373
        %716 = vmatpush1.msra.mxu0 %v372
        %717 = vmatprep.subr.mxu0 %v369
        %718 = vmatpush1.msra.mxu0 %v368
        %719 = vmatprep.subr.mxu0 %v365
        %720 = vmatpush1.msra.mxu0 %v364
        %721 = vmatprep.subr.mxu0 %v361
        %722 = vmatpush1.msra.mxu0 %v360
        %723 = vmatprep.subr.mxu0 %v357
        %724 = vmatpush1.msra.mxu0 %v356
        %725 = vmatprep.subr.mxu0 %v353
        %726 = vmatpush1.msra.mxu0 %v352
        %727 = vmatprep.subr.mxu0 %v349
        %728 = vmatpush1.msra.mxu0 %v348
        %729 = vmatprep.subr.mxu0 %v473
        %730 = vmatpush2.msra.mxu0 %v472
        %731 = vmatprep.subr.mxu0 %v469
        %732 = vmatpush2.msra.mxu0 %v468
        %733 = vmatprep.subr.mxu0 %v465
        %734 = vmatpush2.msra.mxu0 %v464
        %735 = vmatprep.subr.mxu0 %v461
        %736 = vmatpush2.msra.mxu0 %v460
        %737 = vmatprep.subr.mxu0 %v457
        %738 = vmatpush2.msra.mxu0 %v456
        %739 = vmatprep.subr.mxu0 %v453
        %740 = vmatpush2.msra.mxu0 %v452
        %741 = vmatprep.subr.mxu0 %v449
        %742 = vmatpush2.msra.mxu0 %v448
        %743 = vmatprep.subr.mxu0 %v445
        %744 = vmatpush2.msra.mxu0 %v444
        %745 = vmatprep.subr.mxu0 %v441
        %746 = vmatpush2.msra.mxu0 %v440
        %747 = vmatprep.subr.mxu0 %v437
        %748 = vmatpush2.msra.mxu0 %v436
        %749 = vmatprep.subr.mxu0 %v433
        %750 = vmatpush2.msra.mxu0 %v432
        %751 = vmatprep.subr.mxu0 %v429
        %752 = vmatpush2.msra.mxu0 %v428
        %753 = vmatprep.subr.mxu0 %v425
        %754 = vmatpush2.msra.mxu0 %v424
        %755 = vmatprep.subr.mxu0 %v421
        %756 = vmatpush2.msra.mxu0 %v420
        %757 = vmatprep.subr.mxu0 %v417
        %758 = vmatpush2.msra.mxu0 %v416
        %759 = vmatprep.subr.mxu0 %v413
        %760 = vmatpush2.msra.mxu0 %v412
        %761 = vmatprep.mubr.f32.mxu0 %v217
        %762 = vmatmul.mubr.f32.gmra.mxu0 %v216
        %v763 = vpop.f32.mrf.mxu0
        %v764 = vadd.f32 %v693, %v763
        %v765 = vpop.f32.mrf.mxu0
        %v766 = vadd.f32 %v695, %v765
        %767 = vdwg.mxu0
        %768 = vmatprep.subr.mxu0 %v537
        %769 = vmatpush1.msra.mxu0 %v536
        %770 = vmatprep.subr.mxu0 %v533
        %771 = vmatpush1.msra.mxu0 %v532
        %772 = vmatprep.subr.mxu0 %v529
        %773 = vmatpush1.msra.mxu0 %v528
        %774 = vmatprep.subr.mxu0 %v525
        %775 = vmatpush1.msra.mxu0 %v524
        %776 = vmatprep.subr.mxu0 %v521
        %777 = vmatpush1.msra.mxu0 %v520
        %778 = vmatprep.subr.mxu0 %v517
        %779 = vmatpush1.msra.mxu0 %v516
        %780 = vmatprep.subr.mxu0 %v513
        %781 = vmatpush1.msra.mxu0 %v512
        %782 = vmatprep.subr.mxu0 %v509
        %783 = vmatpush1.msra.mxu0 %v508
        %784 = vmatprep.subr.mxu0 %v505
        %785 = vmatpush1.msra.mxu0 %v504
        %786 = vmatprep.subr.mxu0 %v501
        %787 = vmatpush1.msra.mxu0 %v500
        %788 = vmatprep.subr.mxu0 %v497
        %789 = vmatpush1.msra.mxu0 %v496
        %790 = vmatprep.subr.mxu0 %v493
        %791 = vmatpush1.msra.mxu0 %v492
        %792 = vmatprep.subr.mxu0 %v489
        %793 = vmatpush1.msra.mxu0 %v488
        %794 = vmatprep.subr.mxu0 %v485
        %795 = vmatpush1.msra.mxu0 %v484
        %796 = vmatprep.subr.mxu0 %v481
        %797 = vmatpush1.msra.mxu0 %v480
        %798 = vmatprep.subr.mxu0 %v477
        %799 = vmatpush1.msra.mxu0 %v476
        %800 = vmatprep.subr.mxu0 %v601
        %801 = vmatpush2.msra.mxu0 %v600
        %802 = vmatprep.subr.mxu0 %v597
        %803 = vmatpush2.msra.mxu0 %v596
        %804 = vmatprep.subr.mxu0 %v593
        %805 = vmatpush2.msra.mxu0 %v592
        %806 = vmatprep.subr.mxu0 %v589
        %807 = vmatpush2.msra.mxu0 %v588
        %808 = vmatprep.subr.mxu0 %v585
        %809 = vmatpush2.msra.mxu0 %v584
        %810 = vmatprep.subr.mxu0 %v581
        %811 = vmatpush2.msra.mxu0 %v580
        %812 = vmatprep.subr.mxu0 %v577
        %813 = vmatpush2.msra.mxu0 %v576
        %814 = vmatprep.subr.mxu0 %v573
        %815 = vmatpush2.msra.mxu0 %v572
        %816 = vmatprep.subr.mxu0 %v569
        %817 = vmatpush2.msra.mxu0 %v568
        %818 = vmatprep.subr.mxu0 %v565
        %819 = vmatpush2.msra.mxu0 %v564
        %820 = vmatprep.subr.mxu0 %v561
        %821 = vmatpush2.msra.mxu0 %v560
        %822 = vmatprep.subr.mxu0 %v557
        %823 = vmatpush2.msra.mxu0 %v556
        %824 = vmatprep.subr.mxu0 %v553
        %825 = vmatpush2.msra.mxu0 %v552
        %826 = vmatprep.subr.mxu0 %v549
        %827 = vmatpush2.msra.mxu0 %v548
        %828 = vmatprep.subr.mxu0 %v545
        %829 = vmatpush2.msra.mxu0 %v544
        %830 = vmatprep.subr.mxu0 %v541
        %831 = vmatpush2.msra.mxu0 %v540
        %832 = vmatprep.mubr.f32.mxu0 %v219
        %833 = vmatmul.mubr.f32.gmra.mxu0 %v218
        %v834 = vpop.f32.mrf.mxu0
        %v835 = vadd.f32 %v764, %v834
        %v836 = vpop.f32.mrf.mxu0
        %v837 = vadd.f32 %v766, %v836
        %838 = vdwg.mxu0
        %839 = vmatprep.subr.mxu0 %v283
        %840 = vmatpush1.msra.mxu0 %v282
        %841 = vmatprep.subr.mxu0 %v279
        %842 = vmatpush1.msra.mxu0 %v278
        %843 = vmatprep.subr.mxu0 %v275
        %844 = vmatpush1.msra.mxu0 %v274
        %845 = vmatprep.subr.mxu0 %v271
        %846 = vmatpush1.msra.mxu0 %v270
        %847 = vmatprep.subr.mxu0 %v267
        %848 = vmatpush1.msra.mxu0 %v266
        %849 = vmatprep.subr.mxu0 %v263
        %850 = vmatpush1.msra.mxu0 %v262
        %851 = vmatprep.subr.mxu0 %v259
        %852 = vmatpush1.msra.mxu0 %v258
        %853 = vmatprep.subr.mxu0 %v255
        %854 = vmatpush1.msra.mxu0 %v254
        %855 = vmatprep.subr.mxu0 %v251
        %856 = vmatpush1.msra.mxu0 %v250
        %857 = vmatprep.subr.mxu0 %v247
        %858 = vmatpush1.msra.mxu0 %v246
        %859 = vmatprep.subr.mxu0 %v243
        %860 = vmatpush1.msra.mxu0 %v242
        %861 = vmatprep.subr.mxu0 %v239
        %862 = vmatpush1.msra.mxu0 %v238
        %863 = vmatprep.subr.mxu0 %v235
        %864 = vmatpush1.msra.mxu0 %v234
        %865 = vmatprep.subr.mxu0 %v231
        %866 = vmatpush1.msra.mxu0 %v230
        %867 = vmatprep.subr.mxu0 %v227
        %868 = vmatpush1.msra.mxu0 %v226
        %869 = vmatprep.subr.mxu0 %v223
        %870 = vmatpush1.msra.mxu0 %v222
        %871 = vmatprep.subr.mxu0 %v347
        %872 = vmatpush2.msra.mxu0 %v346
        %873 = vmatprep.subr.mxu0 %v343
        %874 = vmatpush2.msra.mxu0 %v342
        %875 = vmatprep.subr.mxu0 %v339
        %876 = vmatpush2.msra.mxu0 %v338
        %877 = vmatprep.subr.mxu0 %v335
        %878 = vmatpush2.msra.mxu0 %v334
        %879 = vmatprep.subr.mxu0 %v331
        %880 = vmatpush2.msra.mxu0 %v330
        %881 = vmatprep.subr.mxu0 %v327
        %882 = vmatpush2.msra.mxu0 %v326
        %883 = vmatprep.subr.mxu0 %v323
        %884 = vmatpush2.msra.mxu0 %v322
        %885 = vmatprep.subr.mxu0 %v319
        %886 = vmatpush2.msra.mxu0 %v318
        %887 = vmatprep.subr.mxu0 %v315
        %888 = vmatpush2.msra.mxu0 %v314
        %889 = vmatprep.subr.mxu0 %v311
        %890 = vmatpush2.msra.mxu0 %v310
        %891 = vmatprep.subr.mxu0 %v307
        %892 = vmatpush2.msra.mxu0 %v306
        %893 = vmatprep.subr.mxu0 %v303
        %894 = vmatpush2.msra.mxu0 %v302
        %895 = vmatprep.subr.mxu0 %v299
        %896 = vmatpush2.msra.mxu0 %v298
        %897 = vmatprep.subr.mxu0 %v295
        %898 = vmatpush2.msra.mxu0 %v294
        %899 = vmatprep.subr.mxu0 %v291
        %900 = vmatpush2.msra.mxu0 %v290
        %901 = vmatprep.subr.mxu0 %v287
        %902 = vmatpush2.msra.mxu0 %v286
        %903 = vmatprep.mubr.f32.mxu0 %v215
        %904 = vmatmul.mubr.f32.gmra.mxu0 %v214
        %v905 = vpop.f32.mrf.mxu0
        %v906 = vadd.f32 %v617, %v905
        %v907 = vpop.f32.mrf.mxu0
        %v908 = vadd.f32 %v621, %v907
        %909 = vdwg.mxu0
        %910 = vmatprep.subr.mxu0 %v411
        %911 = vmatpush1.msra.mxu0 %v410
        %912 = vmatprep.subr.mxu0 %v407
        %913 = vmatpush1.msra.mxu0 %v406
        %914 = vmatprep.subr.mxu0 %v403
        %915 = vmatpush1.msra.mxu0 %v402
        %916 = vmatprep.subr.mxu0 %v399
        %917 = vmatpush1.msra.mxu0 %v398
        %918 = vmatprep.subr.mxu0 %v395
        %919 = vmatpush1.msra.mxu0 %v394
        %920 = vmatprep.subr.mxu0 %v391
        %921 = vmatpush1.msra.mxu0 %v390
        %922 = vmatprep.subr.mxu0 %v387
        %923 = vmatpush1.msra.mxu0 %v386
        %924 = vmatprep.subr.mxu0 %v383
        %925 = vmatpush1.msra.mxu0 %v382
        %926 = vmatprep.subr.mxu0 %v379
        %927 = vmatpush1.msra.mxu0 %v378
        %928 = vmatprep.subr.mxu0 %v375
        %929 = vmatpush1.msra.mxu0 %v374
        %930 = vmatprep.subr.mxu0 %v371
        %931 = vmatpush1.msra.mxu0 %v370
        %932 = vmatprep.subr.mxu0 %v367
        %933 = vmatpush1.msra.mxu0 %v366
        %934 = vmatprep.subr.mxu0 %v363
        %935 = vmatpush1.msra.mxu0 %v362
        %936 = vmatprep.subr.mxu0 %v359
        %937 = vmatpush1.msra.mxu0 %v358
        %938 = vmatprep.subr.mxu0 %v355
        %939 = vmatpush1.msra.mxu0 %v354
        %940 = vmatprep.subr.mxu0 %v351
        %941 = vmatpush1.msra.mxu0 %v350
        %942 = vmatprep.subr.mxu0 %v475
        %943 = vmatpush2.msra.mxu0 %v474
        %944 = vmatprep.subr.mxu0 %v471
        %945 = vmatpush2.msra.mxu0 %v470
        %946 = vmatprep.subr.mxu0 %v467
        %947 = vmatpush2.msra.mxu0 %v466
        %948 = vmatprep.subr.mxu0 %v463
        %949 = vmatpush2.msra.mxu0 %v462
        %950 = vmatprep.subr.mxu0 %v459
        %951 = vmatpush2.msra.mxu0 %v458
        %952 = vmatprep.subr.mxu0 %v455
        %953 = vmatpush2.msra.mxu0 %v454
        %954 = vmatprep.subr.mxu0 %v451
        %955 = vmatpush2.msra.mxu0 %v450
        %956 = vmatprep.subr.mxu0 %v447
        %957 = vmatpush2.msra.mxu0 %v446
        %958 = vmatprep.subr.mxu0 %v443
        %959 = vmatpush2.msra.mxu0 %v442
        %960 = vmatprep.subr.mxu0 %v439
        %961 = vmatpush2.msra.mxu0 %v438
        %962 = vmatprep.subr.mxu0 %v435
        %963 = vmatpush2.msra.mxu0 %v434
        %964 = vmatprep.subr.mxu0 %v431
        %965 = vmatpush2.msra.mxu0 %v430
        %966 = vmatprep.subr.mxu0 %v427
        %967 = vmatpush2.msra.mxu0 %v426
        %968 = vmatprep.subr.mxu0 %v423
        %969 = vmatpush2.msra.mxu0 %v422
        %970 = vmatprep.subr.mxu0 %v419
        %971 = vmatpush2.msra.mxu0 %v418
        %972 = vmatprep.subr.mxu0 %v415
        %973 = vmatpush2.msra.mxu0 %v414
        %974 = vmatprep.mubr.f32.mxu0 %v217
        %975 = vmatmul.mubr.f32.gmra.mxu0 %v216
        %v976 = vpop.f32.mrf.mxu0
        %v977 = vadd.f32 %v906, %v976
        %v978 = vpop.f32.mrf.mxu0
        %v979 = vadd.f32 %v908, %v978
        %980 = vdwg.mxu0
        %981 = vmatprep.subr.mxu0 %v539
        %982 = vmatpush1.msra.mxu0 %v538
        %983 = vmatprep.subr.mxu0 %v535
        %984 = vmatpush1.msra.mxu0 %v534
        %985 = vmatprep.subr.mxu0 %v531
        %986 = vmatpush1.msra.mxu0 %v530
        %987 = vmatprep.subr.mxu0 %v527
        %988 = vmatpush1.msra.mxu0 %v526
        %989 = vmatprep.subr.mxu0 %v523
        %990 = vmatpush1.msra.mxu0 %v522
        %991 = vmatprep.subr.mxu0 %v519
        %992 = vmatpush1.msra.mxu0 %v518
        %993 = vmatprep.subr.mxu0 %v515
        %994 = vmatpush1.msra.mxu0 %v514
        %995 = vmatprep.subr.mxu0 %v511
        %996 = vmatpush1.msra.mxu0 %v510
        %997 = vmatprep.subr.mxu0 %v507
        %998 = vmatpush1.msra.mxu0 %v506
        %999 = vmatprep.subr.mxu0 %v503
        %1000 = vmatpush1.msra.mxu0 %v502
        %1001 = vmatprep.subr.mxu0 %v499
        %1002 = vmatpush1.msra.mxu0 %v498
        %1003 = vmatprep.subr.mxu0 %v495
        %1004 = vmatpush1.msra.mxu0 %v494
        %1005 = vmatprep.subr.mxu0 %v491
        %1006 = vmatpush1.msra.mxu0 %v490
        %1007 = vmatprep.subr.mxu0 %v487
        %1008 = vmatpush1.msra.mxu0 %v486
        %1009 = vmatprep.subr.mxu0 %v483
        %1010 = vmatpush1.msra.mxu0 %v482
        %1011 = vmatprep.subr.mxu0 %v479
        %1012 = vmatpush1.msra.mxu0 %v478
        %1013 = vmatprep.subr.mxu0 %v603
        %1014 = vmatpush2.msra.mxu0 %v602
        %1015 = vmatprep.subr.mxu0 %v599
        %1016 = vmatpush2.msra.mxu0 %v598
        %1017 = vmatprep.subr.mxu0 %v595
        %1018 = vmatpush2.msra.mxu0 %v594
        %1019 = vmatprep.subr.mxu0 %v591
        %1020 = vmatpush2.msra.mxu0 %v590
        %1021 = vmatprep.subr.mxu0 %v587
        %1022 = vmatpush2.msra.mxu0 %v586
        %1023 = vmatprep.subr.mxu0 %v583
        %1024 = vmatpush2.msra.mxu0 %v582
        %1025 = vmatprep.subr.mxu0 %v579
        %1026 = vmatpush2.msra.mxu0 %v578
        %1027 = vmatprep.subr.mxu0 %v575
        %1028 = vmatpush2.msra.mxu0 %v574
        %1029 = vmatprep.subr.mxu0 %v571
        %1030 = vmatpush2.msra.mxu0 %v570
        %1031 = vmatprep.subr.mxu0 %v567
        %1032 = vmatpush2.msra.mxu0 %v566
        %1033 = vmatprep.subr.mxu0 %v563
        %1034 = vmatpush2.msra.mxu0 %v562
        %1035 = vmatprep.subr.mxu0 %v559
        %1036 = vmatpush2.msra.mxu0 %v558
        %1037 = vmatprep.subr.mxu0 %v555
        %1038 = vmatpush2.msra.mxu0 %v554
        %1039 = vmatprep.subr.mxu0 %v551
        %1040 = vmatpush2.msra.mxu0 %v550
        %1041 = vmatprep.subr.mxu0 %v547
        %1042 = vmatpush2.msra.mxu0 %v546
        %1043 = vmatprep.subr.mxu0 %v543
        %1044 = vmatpush2.msra.mxu0 %v542
        %1045 = vmatprep.mubr.f32.mxu0 %v219
        %1046 = vmatmul.mubr.f32.gmra.mxu0 %v218
        %v1047 = vpop.f32.mrf.mxu0
        %v1048 = vadd.f32 %v977, %v1047
        %v1049 = vpop.f32.mrf.mxu0
        %v1050 = vadd.f32 %v979, %v1049
        %1051 = vdwg.mxu0
        %v1052 = vmul.f32 %v835, %v835
        %v1053 = vmul.f32 %v837, %v837
        %v1054 = vmul.f32 %v1048, %v1048
        %v1055 = vmul.f32 %v1050, %v1050
        %v1056 = vmul.f32 %v835, %v1052
        %v1057 = vmul.f32 %v837, %v1053
        %v1058 = vmul.f32 %v1048, %v1054
        %v1059 = vmul.f32 %v1050, %v1055
        %v1060 = vmul.f32 %v1056, 0.044715
        %v1061 = vmul.f32 %v1057, 0.044715
        %v1062 = vmul.f32 %v1058, 0.044715
        %v1063 = vmul.f32 %v1059, 0.044715
        %v1064 = vadd.f32 %v835, %v1060
        %v1065 = vadd.f32 %v837, %v1061
        %v1066 = vadd.f32 %v1048, %v1062
        %v1067 = vadd.f32 %v1050, %v1063
        %v1068 = vmul.f32 %v1064, 0.7978846
        %v1069 = vmul.f32 %v1065, 0.7978846
        %v1070 = vmul.f32 %v1066, 0.7978846
        %v1071 = vmul.f32 %v1067, 0.7978846
        %v1072 = vtanh.pop %v1068
        %v1073 = vtanh.pop %v1069
        %v1074 = vtanh.pop %v1070
        %v1075 = vtanh.pop %v1071
        %v1076 = vadd.f32 %v1072, 1.0
        %v1077 = vadd.f32 %v1073, 1.0
        %v1078 = vadd.f32 %v1074, 1.0
        %v1079 = vadd.f32 %v1075, 1.0
        %v1080 = vmul.f32 %v1076, 0.5
        %v1081 = vmul.f32 %v1077, 0.5
        %v1082 = vmul.f32 %v1078, 0.5
        %v1083 = vmul.f32 %v1079, 0.5
        %v1084 = vmul.f32 %v835, %v1080
        %v1085 = vmul.f32 %v837, %v1081
        %v1086 = vmul.f32 %v1048, %v1082
        %v1087 = vmul.f32 %v1050, %v1083
        %1088 = vst [vmem:[%s213] sm:$0xff] %v1084
        %1089 = vst [vmem:[%s213 + $0x8] sm:$0xff] %v1085
        %1090 = vst [vmem:[%s213 + $0x10] sm:$0xff] %v1086
        %1091 = vst [vmem:[%s213 + $0x18] sm:$0xff] %v1087
        %s1092 = sand.u32 %s97, 1
        %s1093 = scalar_lea.sflag [#allocation4], %s1092
        %s1094 = sand.u32 %s97, 1
        %s1095 = smul.addr %s1094, 32
        %s1096 = scalar_lea.vmem [#allocation8], %s1095
        // Predicated region
        $region45: #{tpu_custom_call.1} parent=31 // pred_check
          %p1097 = pneg %p107
        $region46: #{tpu_custom_call.1} parent=31 // pred_check_branch
          %1099 = sbr.rel (%p1097) target = $region48
        $region47: #{tpu_custom_call.1} parent=31 // pred_region
          %s1101 = ssub.s32 512, 512
          %1102 = vsyncadd %s1093, %s1101
          %s1103 = smul.addr %s21, 4
          %s1104 = smul.addr %s1103, 128
          %s1105 = scalar_lea.hbm %s3, %s1104
          %s1107 = sshll.u32 %s1096, 4
          %s1108 = int_to_ptr.vmem [resolvable:$true] %s1107
          %1110 = dma.vmem_to_hbm [thread:$0]  %s1108, 512, %s1105, %s1093
        $region48: #{tpu_custom_call.1} parent=31 // pred_fallthru
          _
      $region32: #{tpu_custom_call.1} parent=5 // pred_fallthru
        _
      %p1111 = scmp.le.s32.totalorder 2, %s16
      // Predicated region
      $region49: #{tpu_custom_call.1} parent=5 // pred_check
        %p1112 = pneg %p1111
      $region50: #{tpu_custom_call.1} parent=5 // pred_check_branch
        %1114 = sbr.rel (%p1112) target = $region52
      $region51: #{tpu_custom_call.1} parent=5 // pred_region
        %s1115 = ssub.s32 %s16, 2
        // Predicated region
        $region53: #{tpu_custom_call.1} parent=51 // pred_check
          %p1116 = pneg %p113
        $region54: #{tpu_custom_call.1} parent=51 // pred_check_branch
          %1118 = sbr.rel (%p1116) target = $region56
        $region55: #{tpu_custom_call.1} parent=51 // pred_region
          %s1119 = sand.u32 %s98, 1
          %s1120 = scalar_lea.sflag [#allocation4], %s1119
          %s1121 = sand.u32 %s98, 1
          %s1122 = smul.addr %s1121, 32
          %s1123 = scalar_lea.vmem [#allocation8], %s1122
          %1124 = dma.done %s1120, 512
        $region56: #{tpu_custom_call.1} parent=51 // pred_fallthru
          _
      $region52: #{tpu_custom_call.1} parent=5 // pred_fallthru
        _
    $region6: #{tpu_custom_call.1} parent=1 // loop_footer
      %s20 = sadd.s32 1, %s16
    $region7: #{tpu_custom_call.1} parent=1 // loop_footer_branch
      %15 = sbr.rel target = $region3
    $region8: #{tpu_custom_call.1} parent=1 // loop_exit
      _
    %1125 = vsyncpa [#allocation3], 1
    %s1126 = scalar_lea.sflag [#allocation3], 1
    %1127 = vsyncpa %s1126, 1
    %1128 = vsyncpa [#allocation6], 1
    %1129 = vsyncpa [#allocation4], 1
    %s1130 = scalar_lea.sflag [#allocation4], 1
    %1131 = vsyncpa %s1130, 1

</llo_original>
